<compile_context>
chip_gen: v7x
topology: tpu7x:2x2x1
jax: 0.10.0
libtpu: 0.0.40
codegen_flags: <defaults>
</compile_context>

<pallas_src>
import functools

import jax
import jax.numpy as jnp
from jax import lax
from jax.experimental import pallas as pl
from jax.experimental.pallas import tpu as pltpu

BN_EPS = 1e-5
LANES = 128


def _round_up(x, m):
    return ((x + m - 1) // m) * m


# ----------------------------- fused kernel ----------------------------------


def _pad_hw(v, top, bottom, left, right):
    """Zero-pad the two leading (H, W) dims of an (H, W, C) value, in VMEM."""
    h, w, c = v.shape
    if left or right:
        parts = []
        if left:
            parts.append(jnp.zeros((h, left, c), v.dtype))
        parts.append(v)
        if right:
            parts.append(jnp.zeros((h, right, c), v.dtype))
        v = jnp.concatenate(parts, axis=1)
        w += left + right
    if top or bottom:
        parts = []
        if top:
            parts.append(jnp.zeros((top, w, c), v.dtype))
        parts.append(v)
        if bottom:
            parts.append(jnp.zeros((bottom, w, c), v.dtype))
        v = jnp.concatenate(parts, axis=0)
    return v


def _basic_block_kernel(x_ref, w1_ref, b1_ref, w2_ref, b2_ref, ws_ref, bs_ref,
                        *out_refs, stride, with_preact):
    """Fused BasicBlock for one batch element.

    Layout (per grid step):
      x_ref  : (1, Ho, Wo, Cin)           for stride == 1  (Cin = in_planes)
               (1, Ho, Wo, 4*Cin)         for stride == 2  (space-to-depth)
      w1_ref : (taps*Cin, planes)   bf16, BN1 scale folded
      b1_ref : (1, planes)          f32
      w2_ref : (9*planes, Coutp)    bf16, BN2 scale folded, Cout padded to 128
      b2_ref : (1, Coutp)           f32
      ws_ref : (Cin, Coutp)         bf16 (identity matrix if no conv shortcut)
      bs_ref : (1, Coutp)           f32
      out    : (1, Ho, Wo, Coutp)   f32  (+ preact if with_preact)
    """
    ho, wo = out_refs[0].shape[1], out_refs[0].shape[2]
    planes = b1_ref.shape[-1]
    coutp = out_refs[0].shape[-1]

    # Single bf16 cast at load; everything feeding the MXU stays bf16.
    x = x_ref[0].astype(jnp.bfloat16)                      # (Ho, Wo, Cin_k)

    # ---- conv1 (+ folded BN1 scale) as ONE im2col matmul -------------------
    if stride == 1:
        xp = _pad_hw(x, 1, 1, 1, 1)                        # pad=1 all around
        offs = [(dy, dx) for dy in range(3) for dx in range(3)]
        cin_s = x.shape[-1]
        xs = x                                             # shortcut input
    else:  # stride == 2: space-to-depth layout -> 2x2 stride-1 conv,
        #                 zero block-pad only on top/left.
        xp = _pad_hw(x, 1, 0, 1, 0)
        offs = [(e, f) for e in range(2) for f in range(2)]
        cin_s = x.shape[-1] // (stride * stride)
        xs = x[:, :, :cin_s]                               # phase (0,0) == x[::2, ::2]

    patches = [xp[a:a + ho, b:b + wo, :] for a, b in offs]
    cols1 = jnp.concatenate(patches, axis=-1).reshape(ho * wo, -1)
    y1 = jnp.dot(cols1, w1_ref[...], preferred_element_type=jnp.float32)
    y1 = jnp.maximum(y1 + b1_ref[...], 0.0)                # (Ho*Wo, planes) f32

    # ---- shortcut: 1x1 conv (+ folded BNs); identity handled via eye weight -
    sc = jnp.dot(xs.reshape(ho * wo, cin_s), ws_ref[...],
                 preferred_element_type=jnp.float32) + bs_ref[...]  # (Ho*Wo, Coutp)

    # ---- conv2 (+ folded BN2 scale) + residual add + relu ------------------
    y1p = _pad_hw(y1.reshape(ho, wo, planes).astype(jnp.bfloat16), 1, 1, 1, 1)
    patches2 = [y1p[dy:dy + ho, dx:dx + wo, :] for dy in range(3) for dx in range(3)]
    cols2 = jnp.concatenate(patches2, axis=-1).reshape(ho * wo, 9 * planes)
    pre = jnp.dot(cols2, w2_ref[...], preferred_element_type=jnp.float32)
    pre = pre + b2_ref[...] + sc
    out = jnp.maximum(pre, 0.0)

    out_refs[0][...] = out.reshape(1, ho, wo, coutp)
    if with_preact:
        out_refs[1][...] = pre.reshape(1, ho, wo, coutp)


# --------------------- parameter preparation (done ONCE) ---------------------


def _fold_bn(gamma, beta, mean, var):
    scale = gamma / jnp.sqrt(var + BN_EPS)
    bias = beta - mean * scale
    return scale.astype(jnp.float32), bias.astype(jnp.float32)


def _space_to_depth_weights(taps):
    """(3,3,Cin,P) stride-2 taps -> (16*Cin, P) 2x2 phase weights.

    Row order (e, f, p, q, c) matches the kernel's patch/channel order:
    (e,f) = block offset of the 2x2 conv, (p,q) = spatial phase inside a block.
    """
    _, _, cin, p = taps.shape
    w = jnp.zeros((2, 2, 2, 2, cin, p), taps.dtype)
    emap = {(0, 1): 0, (1, 0): 1, (1, 1): 2}   # (block_off, phase) -> 3x3 tap
    for (e, ph), dy in emap.items():
        for (f, qh), dx in emap.items():
            w = w.at[e, f, ph, qh].set(taps[dy, dx])
    return w.reshape(2 * 2 * 2 * 2 * cin, p)


def prepare_params(raw, *, stride):
    """Fold BN into weights, pre-transpose to (K, Coutp) matrices, cast bf16."""
    planes, in_planes = raw["w1"].shape[0], raw["w1"].shape[1]
    coutp = _round_up(planes, LANES)

    s1, b1 = _fold_bn(raw["bn1_gamma"], raw["bn1_beta"],
                      raw["bn1_mean"], raw["bn1_var"])
    taps1 = jnp.transpose(raw["w1"], (2, 3, 1, 0)) * s1        # (3,3,Cin,P)
    if stride == 1:
        w1 = taps1.reshape(9 * in_planes, planes)
    elif stride == 2:
        w1 = _space_to_depth_weights(taps1)                    # (16*Cin, P)
    else:
        raise NotImplementedError("BasicBlock kernel supports stride 1 or 2")

    s2, b2 = _fold_bn(raw["bn2_gamma"], raw["bn2_beta"],
                      raw["bn2_mean"], raw["bn2_var"])
    w2 = (jnp.transpose(raw["w2"], (2, 3, 1, 0)) * s2).reshape(9 * planes, planes)

    if "ws" in raw:
        ss, bs = _fold_bn(raw["bns_gamma"], raw["bns_beta"],
                          raw["bns_mean"], raw["bns_var"])
        ws = jnp.transpose(raw["ws"], (2, 3, 1, 0))[0, 0] * ss  # (Cin, P)
    else:
        ws = jnp.eye(in_planes, planes, dtype=jnp.float32)      # identity shortcut
        bs = jnp.zeros((planes,), jnp.float32)

    pad_cols = lambda a: jnp.pad(a, ((0, 0), (0, coutp - planes)))
    pad_vec = lambda v: jnp.pad(v, (0, coutp - planes)).reshape(1, coutp)
    return {
        "w1": w1.astype(jnp.bfloat16),
        "b1": b1.reshape(1, planes).astype(jnp.float32),
        "w2": pad_cols(w2).astype(jnp.bfloat16),
        "b2": pad_vec(b2).astype(jnp.float32),
        "ws": pad_cols(ws).astype(jnp.bfloat16),
        "bs": pad_vec(bs).astype(jnp.float32),
    }


# ------------------------------ forward wrapper -------------------------------


def _const_spec(a):
    nd = a.ndim
    return pl.BlockSpec(a.shape, lambda i, _nd=nd: (0,) * _nd)


@functools.partial(jax.jit, static_argnames=("stride", "is_last"))
def basic_block_forward(x_nchw, prep, *, stride, is_last):
    n, c, h, w = x_nchw.shape
    planes = prep["b1"].shape[-1]
    coutp = prep["w2"].shape[-1]
    x = x_nchw.astype(jnp.float32)

    # Layout plumbing in XLA: NCHW -> NHWC, plus space-to-depth for stride 2 so
    # the kernel only ever touches the kept output positions.
    if stride == 1:
        ho, wo = h, w
        xk = jnp.transpose(x, (0, 2, 3, 1))                          # (N,H,W,C)
    else:
        assert stride == 2 and h % 2 == 0 and w % 2 == 0
        ho, wo = h // 2, w // 2
        xk = jnp.transpose(x.reshape(n, c, ho, 2, wo, 2),
                           (0, 2, 4, 3, 5, 1)).reshape(n, ho, wo, 4 * c)

    kernel = functools.partial(_basic_block_kernel, stride=stride,
                               with_preact=is_last)

    out_sds = jax.ShapeDtypeStruct((n, ho, wo, coutp), jnp.float32)
    out_spec = pl.BlockSpec((1, ho, wo, coutp), lambda i: (i, 0, 0, 0))
    if is_last:
        out_shape = (out_sds, out_sds)
        out_specs = (out_spec, out_spec)
    else:
        out_shape = out_sds
        out_specs = out_spec

    res = pl.pallas_call(
        kernel,
        out_shape=out_shape,
        grid=(n,),
        in_specs=[
            pl.BlockSpec((1,) + xk.shape[1:], lambda i: (i, 0, 0, 0)),
            _const_spec(prep["w1"]), _const_spec(prep["b1"]),
            _const_spec(prep["w2"]), _const_spec(prep["b2"]),
            _const_spec(prep["ws"]), _const_spec(prep["bs"]),
        ],
        out_specs=out_specs,
        compiler_params=pltpu.CompilerParams(
            dimension_semantics=("parallel",),
            # Sized for v7x's 64 MiB physical VMEM with headroom; also fine on
            # v5e/v6e (128 MiB).  Blocks here are per-sample slabs well below it.
            vmem_limit_bytes=32 * 1024 * 1024,
        ),
    )(xk, prep["w1"], prep["b1"], prep["w2"], prep["b2"],
      prep["ws"], prep["bs"])

    if is_last:
        out, pre = res
        out_nchw = jnp.transpose(out[..., :planes], (0, 3, 1, 2))
        pre_nchw = jnp.transpose(pre[..., :planes], (0, 3, 1, 2))
        return out_nchw, pre_nchw
    out_nchw = jnp.transpose(res[..., :planes], (0, 3, 1, 2))
    return out_nchw


# ------------------------ deterministic parameter init ------------------------


def init_params(key, in_planes, planes, stride):
    ks = jax.random.split(key, 16)
    p = {
        "w1": 0.1 * jax.random.normal(ks[0], (planes, in_planes, 3, 3), jnp.float32),
        "bn1_gamma": 1.0 + 0.1 * jax.random.normal(ks[1], (planes,), jnp.float32),
        "bn1_beta": 0.1 * jax.random.normal(ks[2], (planes,), jnp.float32),
        "bn1_mean": 0.1 * jax.random.normal(ks[3], (planes,), jnp.float32),
        "bn1_var": jax.random.uniform(ks[4], (planes,), jnp.float32, 0.5, 1.5),
        "w2": 0.1 * jax.random.normal(ks[5], (planes, planes, 3, 3), jnp.float32),
        "bn2_gamma": 1.0 + 0.1 * jax.random.normal(ks[6], (planes,), jnp.float32),
        "bn2_beta": 0.1 * jax.random.normal(ks[7], (planes,), jnp.float32),
        "bn2_mean": 0.1 * jax.random.normal(ks[8], (planes,), jnp.float32),
        "bn2_var": jax.random.uniform(ks[9], (planes,), jnp.float32, 0.5, 1.5),
    }
    if stride != 1 or in_planes != planes:
        p.update({
            "ws": 0.1 * jax.random.normal(ks[10], (planes, in_planes, 1, 1),
                                          jnp.float32),
            "bns_gamma": 1.0 + 0.1 * jax.random.normal(ks[11], (planes,), jnp.float32),
            "bns_beta": 0.1 * jax.random.normal(ks[12], (planes,), jnp.float32),
            "bns_mean": 0.1 * jax.random.normal(ks[13], (planes,), jnp.float32),
            "bns_var": jax.random.uniform(ks[14], (planes,), jnp.float32, 0.5, 1.5),
        })
    return p


# ------------------------------ pure-JAX reference ----------------------------


def reference_forward(x, p, *, stride, is_last):
    def conv(x, w, s, pad):
        return lax.conv_general_dilated(
            x, w, (s, s), ((pad, pad), (pad, pad)),
            dimension_numbers=("NCHW", "OIHW", "NCHW"))

    def bn(x, g, b, m, v):
        sh = (1, -1, 1, 1)
        return ((x - m.reshape(sh)) / jnp.sqrt(v.reshape(sh) + BN_EPS)
                * g.reshape(sh) + b.reshape(sh))

    out = jax.nn.relu(bn(conv(x, p["w1"], stride, 1),
                         p["bn1_gamma"], p["bn1_beta"], p["bn1_mean"], p["bn1_var"]))
    out = bn(conv(out, p["w2"], 1, 1),
             p["bn2_gamma"], p["bn2_beta"], p["bn2_mean"], p["bn2_var"])
    if "ws" in p:
        sc = bn(conv(x, p["ws"], stride, 0),
                p["bns_gamma"], p["bns_beta"], p["bns_mean"], p["bns_var"])
    else:
        sc = x
    preact = out + sc
    out = jax.nn.relu(preact)
    return (out, preact) if is_last else out


# ----------------------------------- main -------------------------------------

if __name__ == "__main__":
    # Kernel matmuls use bf16 operands (f32 accumulation); tolerance reflects
    # bf16 quantization of inputs/folded weights (~1e-2 worst case here).
    TOL = dict(atol=5e-2, rtol=5e-2)

    key = jax.random.PRNGKey(0)
    kx, kp1, kp2 = jax.random.split(key, 3)

    # Case 1: stride-2 block with 1x1-conv shortcut, is_last=True.
    N, in_planes, planes, H, W, stride = 2, 4, 8, 16, 16, 2
    x = jax.random.normal(kx, (N, in_planes, H, W), jnp.float32)
    raw1 = init_params(kp1, in_planes, planes, stride)
    prep1 = prepare_params(raw1, stride=stride)

    out, preact = basic_block_forward(x, prep1, stride=stride, is_last=True)
    out = jax.block_until_ready(out)
    preact = jax.block_until_ready(preact)

    ref_out, ref_pre = reference_forward(x, raw1, stride=stride, is_last=True)
    assert out.shape == (N, planes, H // stride, W // stride), out.shape
    assert preact.shape == out.shape
    assert jnp.allclose(out, ref_out, **TOL)
    assert jnp.allclose(preact, ref_pre, **TOL)

    # Case 2: stride-1 identity-shortcut block, is_last=False (no preact write).
    x2 = ref_out                               # (N, planes, 8, 8)
    raw2 = init_params(kp2, planes, planes, 1)
    prep2 = prepare_params(raw2, stride=1)
    out2 = basic_block_forward(x2, prep2, stride=1, is_last=False)
    out2 = jax.block_until_ready(out2)
    ref2 = reference_forward(x2, raw2, stride=1, is_last=False)
    assert out2.shape == x2.shape, out2.shape
    assert jnp.allclose(out2, ref2, **TOL)

    print("KERNEL_OK")
</pallas_src>

<mosaic_0001>
module attributes {stable_mosaic.version = 11 : i64} {
  func.func @_basic_block_kernel(%arg0: i32, %arg1: memref<1x8x8x16xf32, #tpu.memory_space<vmem>>, %arg2: memref<64x8xbf16, #tpu.memory_space<vmem>>, %arg3: memref<1x8xf32, #tpu.memory_space<vmem>>, %arg4: memref<72x128xbf16, #tpu.memory_space<vmem>>, %arg5: memref<1x128xf32, #tpu.memory_space<vmem>>, %arg6: memref<4x128xbf16, #tpu.memory_space<vmem>>, %arg7: memref<1x128xf32, #tpu.memory_space<vmem>>, %arg8: memref<1x8x8x128xf32, #tpu.memory_space<vmem>>, %arg9: memref<1x8x8x128xf32, #tpu.memory_space<vmem>>) attributes {dimension_semantics = [#tpu.dimension_semantics<parallel>], iteration_bounds = array<i64: 2>, scalar_prefetch = 0 : i64, scratch_operands = 0 : i64, tpu.core_type = #tpu.core_type<tc>, window_params = [{transform_indices = @transform_0, window_bounds = array<i64: 1, 8, 8, 16>}, {pipeline_mode = #tpu.pipeline_mode<synchronous>, transform_indices = @transform_1, window_bounds = array<i64: 64, 8>}, {pipeline_mode = #tpu.pipeline_mode<synchronous>, transform_indices = @transform_2, window_bounds = array<i64: 1, 8>}, {pipeline_mode = #tpu.pipeline_mode<synchronous>, transform_indices = @transform_3, window_bounds = array<i64: 72, 128>}, {pipeline_mode = #tpu.pipeline_mode<synchronous>, transform_indices = @transform_4, window_bounds = array<i64: 1, 128>}, {pipeline_mode = #tpu.pipeline_mode<synchronous>, transform_indices = @transform_5, window_bounds = array<i64: 4, 128>}, {pipeline_mode = #tpu.pipeline_mode<synchronous>, transform_indices = @transform_6, window_bounds = array<i64: 1, 128>}, {transform_indices = @transform_7, window_bounds = array<i64: 1, 8, 8, 128>}, {transform_indices = @transform_8, window_bounds = array<i64: 1, 8, 8, 128>}]} {
    %c0 = arith.constant 0 : index
    %c0_0 = arith.constant 0 : index
    %c0_1 = arith.constant 0 : index
    %c0_2 = arith.constant 0 : index
    %0 = vector.load %arg1[%c0, %c0_0, %c0_1, %c0_2] : memref<1x8x8x16xf32, #tpu.memory_space<vmem>>, vector<1x8x8x16xf32>
    %1 = vector.shape_cast %0 : vector<1x8x8x16xf32> to vector<8x8x16xf32>
    %2 = arith.truncf %1 : vector<8x8x16xf32> to vector<8x8x16xbf16>
    %cst = arith.constant 0.000000e+00 : bf16
    %3 = vector.broadcast %cst : bf16 to vector<8x1x16xbf16>
    %4 = tpu.concatenate %3, %2 in 1 : vector<8x1x16xbf16>, vector<8x8x16xbf16> -> vector<8x9x16xbf16>
    %cst_3 = arith.constant 0.000000e+00 : bf16
    %5 = vector.broadcast %cst_3 : bf16 to vector<1x9x16xbf16>
    %6 = tpu.concatenate %5, %4 in 0 : vector<1x9x16xbf16>, vector<8x9x16xbf16> -> vector<9x9x16xbf16>
    %7 = vector.extract_strided_slice %2 {offsets = [0, 0, 0], sizes = [8, 8, 4], strides = [1, 1, 1]} : vector<8x8x16xbf16> to vector<8x8x4xbf16>
    %8 = vector.extract_strided_slice %6 {offsets = [0, 0, 0], sizes = [8, 8, 16], strides = [1, 1, 1]} : vector<9x9x16xbf16> to vector<8x8x16xbf16>
    %9 = vector.extract_strided_slice %6 {offsets = [0, 1, 0], sizes = [8, 8, 16], strides = [1, 1, 1]} : vector<9x9x16xbf16> to vector<8x8x16xbf16>
    %10 = vector.extract_strided_slice %6 {offsets = [1, 0, 0], sizes = [8, 8, 16], strides = [1, 1, 1]} : vector<9x9x16xbf16> to vector<8x8x16xbf16>
    %11 = vector.extract_strided_slice %6 {offsets = [1, 1, 0], sizes = [8, 8, 16], strides = [1, 1, 1]} : vector<9x9x16xbf16> to vector<8x8x16xbf16>
    %12 = tpu.concatenate %8, %9, %10, %11 in 2 : vector<8x8x16xbf16>, vector<8x8x16xbf16>, vector<8x8x16xbf16>, vector<8x8x16xbf16> -> vector<8x8x64xbf16>
    %13 = vector.shape_cast %12 : vector<8x8x64xbf16> to vector<64x64xbf16>
    %c0_4 = arith.constant 0 : index
    %c0_5 = arith.constant 0 : index
    %14 = vector.load %arg2[%c0_4, %c0_5] : memref<64x8xbf16, #tpu.memory_space<vmem>>, vector<64x8xbf16>
    %cst_6 = arith.constant dense<0.000000e+00> : vector<64x8xf32>
    %15 = tpu.matmul %13, %14, %cst_6 {dimension_numbers = #tpu.dot_dimension_numbers<[1], [0], [0], [1], [0, 0, 1, 1], [], []>} : vector<64x64xbf16>, vector<64x8xbf16>, vector<64x8xf32> -> vector<64x8xf32>
    %c0_7 = arith.constant 0 : index
    %c0_8 = arith.constant 0 : index
    %16 = vector.load %arg3[%c0_7, %c0_8] : memref<1x8xf32, #tpu.memory_space<vmem>>, vector<1x8xf32>
    %17 = vector.broadcast %16 : vector<1x8xf32> to vector<64x8xf32>
    %18 = arith.addf %15, %17 : vector<64x8xf32>
    %cst_9 = arith.constant 0.000000e+00 : f32
    %19 = vector.broadcast %cst_9 : f32 to vector<64x8xf32>
    %20 = arith.maximumf %18, %19 : vector<64x8xf32>
    %21 = vector.shape_cast %7 : vector<8x8x4xbf16> to vector<64x4xbf16>
    %c0_10 = arith.constant 0 : index
    %c0_11 = arith.constant 0 : index
    %22 = vector.load %arg6[%c0_10, %c0_11] : memref<4x128xbf16, #tpu.memory_space<vmem>>, vector<4x128xbf16>
    %cst_12 = arith.constant dense<0.000000e+00> : vector<64x128xf32>
    %23 = tpu.matmul %21, %22, %cst_12 {dimension_numbers = #tpu.dot_dimension_numbers<[1], [0], [0], [1], [0, 0, 1, 1], [], []>} : vector<64x4xbf16>, vector<4x128xbf16>, vector<64x128xf32> -> vector<64x128xf32>
    %c0_13 = arith.constant 0 : index
    %c0_14 = arith.constant 0 : index
    %24 = vector.load %arg7[%c0_13, %c0_14] : memref<1x128xf32, #tpu.memory_space<vmem>>, vector<1x128xf32>
    %25 = vector.broadcast %24 : vector<1x128xf32> to vector<64x128xf32>
    %26 = arith.addf %23, %25 : vector<64x128xf32>
    %27 = vector.shape_cast %20 : vector<64x8xf32> to vector<8x8x8xf32>
    %28 = arith.truncf %27 : vector<8x8x8xf32> to vector<8x8x8xbf16>
    %cst_15 = arith.constant 0.000000e+00 : bf16
    %29 = vector.broadcast %cst_15 : bf16 to vector<8x1x8xbf16>
    %cst_16 = arith.constant 0.000000e+00 : bf16
    %30 = vector.broadcast %cst_16 : bf16 to vector<8x1x8xbf16>
    %31 = tpu.concatenate %29, %28, %30 in 1 : vector<8x1x8xbf16>, vector<8x8x8xbf16>, vector<8x1x8xbf16> -> vector<8x10x8xbf16>
    %cst_17 = arith.constant 0.000000e+00 : bf16
    %32 = vector.broadcast %cst_17 : bf16 to vector<1x10x8xbf16>
    %cst_18 = arith.constant 0.000000e+00 : bf16
    %33 = vector.broadcast %cst_18 : bf16 to vector<1x10x8xbf16>
    %34 = tpu.concatenate %32, %31, %33 in 0 : vector<1x10x8xbf16>, vector<8x10x8xbf16>, vector<1x10x8xbf16> -> vector<10x10x8xbf16>
    %35 = vector.extract_strided_slice %34 {offsets = [0, 0, 0], sizes = [8, 8, 8], strides = [1, 1, 1]} : vector<10x10x8xbf16> to vector<8x8x8xbf16>
    %36 = vector.extract_strided_slice %34 {offsets = [0, 1, 0], sizes = [8, 8, 8], strides = [1, 1, 1]} : vector<10x10x8xbf16> to vector<8x8x8xbf16>
    %37 = vector.extract_strided_slice %34 {offsets = [0, 2, 0], sizes = [8, 8, 8], strides = [1, 1, 1]} : vector<10x10x8xbf16> to vector<8x8x8xbf16>
    %38 = vector.extract_strided_slice %34 {offsets = [1, 0, 0], sizes = [8, 8, 8], strides = [1, 1, 1]} : vector<10x10x8xbf16> to vector<8x8x8xbf16>
    %39 = vector.extract_strided_slice %34 {offsets = [1, 1, 0], sizes = [8, 8, 8], strides = [1, 1, 1]} : vector<10x10x8xbf16> to vector<8x8x8xbf16>
    %40 = vector.extract_strided_slice %34 {offsets = [1, 2, 0], sizes = [8, 8, 8], strides = [1, 1, 1]} : vector<10x10x8xbf16> to vector<8x8x8xbf16>
    %41 = vector.extract_strided_slice %34 {offsets = [2, 0, 0], sizes = [8, 8, 8], strides = [1, 1, 1]} : vector<10x10x8xbf16> to vector<8x8x8xbf16>
    %42 = vector.extract_strided_slice %34 {offsets = [2, 1, 0], sizes = [8, 8, 8], strides = [1, 1, 1]} : vector<10x10x8xbf16> to vector<8x8x8xbf16>
    %43 = vector.extract_strided_slice %34 {offsets = [2, 2, 0], sizes = [8, 8, 8], strides = [1, 1, 1]} : vector<10x10x8xbf16> to vector<8x8x8xbf16>
    %44 = tpu.concatenate %35, %36, %37, %38, %39, %40, %41, %42, %43 in 2 : vector<8x8x8xbf16>, vector<8x8x8xbf16>, vector<8x8x8xbf16>, vector<8x8x8xbf16>, vector<8x8x8xbf16>, vector<8x8x8xbf16>, vector<8x8x8xbf16>, vector<8x8x8xbf16>, vector<8x8x8xbf16> -> vector<8x8x72xbf16>
    %45 = vector.shape_cast %44 : vector<8x8x72xbf16> to vector<64x72xbf16>
    %c0_19 = arith.constant 0 : index
    %c0_20 = arith.constant 0 : index
    %46 = vector.load %arg4[%c0_19, %c0_20] : memref<72x128xbf16, #tpu.memory_space<vmem>>, vector<72x128xbf16>
    %cst_21 = arith.constant dense<0.000000e+00> : vector<64x128xf32>
    %47 = tpu.matmul %45, %46, %cst_21 {dimension_numbers = #tpu.dot_dimension_numbers<[1], [0], [0], [1], [0, 0, 1, 1], [], []>} : vector<64x72xbf16>, vector<72x128xbf16>, vector<64x128xf32> -> vector<64x128xf32>
    %c0_22 = arith.constant 0 : index
    %c0_23 = arith.constant 0 : index
    %48 = vector.load %arg5[%c0_22, %c0_23] : memref<1x128xf32, #tpu.memory_space<vmem>>, vector<1x128xf32>
    %49 = vector.broadcast %48 : vector<1x128xf32> to vector<64x128xf32>
    %50 = arith.addf %47, %49 : vector<64x128xf32>
    %51 = arith.addf %50, %26 : vector<64x128xf32>
    %cst_24 = arith.constant 0.000000e+00 : f32
    %52 = vector.broadcast %cst_24 : f32 to vector<64x128xf32>
    %53 = arith.maximumf %51, %52 : vector<64x128xf32>
    %54 = vector.shape_cast %53 : vector<64x128xf32> to vector<1x8x8x128xf32>
    %c0_25 = arith.constant 0 : index
    %c0_26 = arith.constant 0 : index
    %c0_27 = arith.constant 0 : index
    %c0_28 = arith.constant 0 : index
    %55 = vector.load %arg8[%c0_25, %c0_26, %c0_27, %c0_28] : memref<1x8x8x128xf32, #tpu.memory_space<vmem>>, vector<1x8x8x128xf32>
    tpu.vector_store %arg8[%c0_25, %c0_26, %c0_27, %c0_28], %54 {strides = array<i32>} : memref<1x8x8x128xf32, #tpu.memory_space<vmem>>, vector<1x8x8x128xf32>,
    %56 = vector.shape_cast %51 : vector<64x128xf32> to vector<1x8x8x128xf32>
    %c0_29 = arith.constant 0 : index
    %c0_30 = arith.constant 0 : index
    %c0_31 = arith.constant 0 : index
    %c0_32 = arith.constant 0 : index
    %57 = vector.load %arg9[%c0_29, %c0_30, %c0_31, %c0_32] : memref<1x8x8x128xf32, #tpu.memory_space<vmem>>, vector<1x8x8x128xf32>
    tpu.vector_store %arg9[%c0_29, %c0_30, %c0_31, %c0_32], %56 {strides = array<i32>} : memref<1x8x8x128xf32, #tpu.memory_space<vmem>>, vector<1x8x8x128xf32>,
    return
  }
  func.func @transform_0(%arg0: i32) -> (i32, i32, i32, i32) {
    %c0_i32 = arith.constant 0 : i32
    %c0_i32_0 = arith.constant 0 : i32
    %c0_i32_1 = arith.constant 0 : i32
    %c0_i32_2 = arith.constant 0 : i32
    return %arg0, %c0_i32, %c0_i32_0, %c0_i32_1 : i32, i32, i32, i32
  }
  func.func @transform_1(%arg0: i32) -> (i32, i32) {
    %c0_i32 = arith.constant 0 : i32
    %c0_i32_0 = arith.constant 0 : i32
    %c0_i32_1 = arith.constant 0 : i32
    return %c0_i32, %c0_i32_0 : i32, i32
  }
  func.func @transform_2(%arg0: i32) -> (i32, i32) {
    %c0_i32 = arith.constant 0 : i32
    %c0_i32_0 = arith.constant 0 : i32
    %c0_i32_1 = arith.constant 0 : i32
    return %c0_i32, %c0_i32_0 : i32, i32
  }
  func.func @transform_3(%arg0: i32) -> (i32, i32) {
    %c0_i32 = arith.constant 0 : i32
    %c0_i32_0 = arith.constant 0 : i32
    %c0_i32_1 = arith.constant 0 : i32
    return %c0_i32, %c0_i32_0 : i32, i32
  }
  func.func @transform_4(%arg0: i32) -> (i32, i32) {
    %c0_i32 = arith.constant 0 : i32
    %c0_i32_0 = arith.constant 0 : i32
    %c0_i32_1 = arith.constant 0 : i32
    return %c0_i32, %c0_i32_0 : i32, i32
  }
  func.func @transform_5(%arg0: i32) -> (i32, i32) {
    %c0_i32 = arith.constant 0 : i32
    %c0_i32_0 = arith.constant 0 : i32
    %c0_i32_1 = arith.constant 0 : i32
    return %c0_i32, %c0_i32_0 : i32, i32
  }
  func.func @transform_6(%arg0: i32) -> (i32, i32) {
    %c0_i32 = arith.constant 0 : i32
    %c0_i32_0 = arith.constant 0 : i32
    %c0_i32_1 = arith.constant 0 : i32
    return %c0_i32, %c0_i32_0 : i32, i32
  }
  func.func @transform_7(%arg0: i32) -> (i32, i32, i32, i32) {
    %c0_i32 = arith.constant 0 : i32
    %c0_i32_0 = arith.constant 0 : i32
    %c0_i32_1 = arith.constant 0 : i32
    %c0_i32_2 = arith.constant 0 : i32
    return %arg0, %c0_i32, %c0_i32_0, %c0_i32_1 : i32, i32, i32, i32
  }
  func.func @transform_8(%arg0: i32) -> (i32, i32, i32, i32) {
    %c0_i32 = arith.constant 0 : i32
    %c0_i32_0 = arith.constant 0 : i32
    %c0_i32_1 = arith.constant 0 : i32
    %c0_i32_2 = arith.constant 0 : i32
    return %arg0, %c0_i32, %c0_i32_0, %c0_i32_1 : i32, i32, i32, i32
  }
}

</mosaic_0001>

<llo_original>
// kernel: basic_block_forward.1
$region0: #{basic_block_forward.1}
  #allocation0 [shape = 'u32[]', space=smem, size = 0x4, offset = 0x4, fixed_abs, tag = 'smem constant byte address 0x4 - core index']
  #allocation1 [shape = 'u32[144,128]{1,0:T(1,128)}', space=vmem, size = 0x12000, scoped, tag = 'internal scratch']
  %s0 = inlined_call_operand.vmem [shape: f32[2,8,8,16], index: 0, kind: input, shape index: {}]
  %s1 = inlined_call_operand.vmem [shape: bf16[64,8], index: 1, kind: input, shape index: {}]
  %s2 = inlined_call_operand.vmem [shape: f32[1,8], index: 2, kind: input, shape index: {}]
  %s3 = inlined_call_operand.vmem [shape: bf16[72,128], index: 3, kind: input, shape index: {}]
  %s4 = inlined_call_operand.vmem [shape: f32[1,128], index: 4, kind: input, shape index: {}]
  %s5 = inlined_call_operand.vmem [shape: bf16[4,128], index: 5, kind: input, shape index: {}]
  %s6 = inlined_call_operand.vmem [shape: f32[1,128], index: 6, kind: input, shape index: {}]
  %s7 = inlined_call_operand.vmem [shape: f32[2,8,8,128], index: 7, kind: output, shape index: {0}]
  %s8 = inlined_call_operand.vmem [shape: f32[2,8,8,128], index: 8, kind: output, shape index: {1}]
  %9 = xla_tuple %s7, %s8
  %s10 = sld [smem:[#allocation0]]
  $region69: #{basic_block_forward.1} parent=0
    _
  %s12 = ssub.s32 1, %s10
  %s13 = scalar_select 0, %s12, %s10
  loop: start=0, step=1, limit=4
  $region2: #{basic_block_forward.1} parent=0 // loop_pre_header
    _
  $region3: #{basic_block_forward.1} parent=0 // loop_header
    %s15 = sphi 0, %s19
    %p16 = scmp.ge.s32.totalorder %s15, 4
    %s25 = sphi 0, %s27
    %s28 = sphi 0, %s25
    %s29 = sphi 0, %s28
    %s45 = sphi 0, %s29
    %s49 = sphi 0, %s49
    %s51 = sphi 0, %s49
    %s52 = sphi 0, %s51
    %s66 = sphi 0, %s52
    %s70 = sphi 0, %s70
    %s72 = sphi 0, %s70
    %s73 = sphi 0, %s72
    %s87 = sphi 0, %s73
    %s91 = sphi 0, %s91
    %s93 = sphi 0, %s91
    %s94 = sphi 0, %s93
    %s108 = sphi 0, %s94
    %s112 = sphi 0, %s112
    %s114 = sphi 0, %s112
    %s115 = sphi 0, %s114
    %s129 = sphi 0, %s115
    %s133 = sphi 0, %s133
    %s135 = sphi 0, %s133
    %s136 = sphi 0, %s135
    %s150 = sphi 0, %s136
    %s154 = sphi 0, %s154
    %s156 = sphi 0, %s154
    %s157 = sphi 0, %s156
    %s171 = sphi 0, %s157
    %s177 = sphi 0, %s179
    %s180 = sphi 0, %s177
    %s181 = sphi 0, %s180
    %s197 = sphi 0, %s181
    %s203 = sphi 0, %s205
    %s206 = sphi 0, %s203
    %s207 = sphi 0, %s206
    %s223 = sphi 0, %s207
  $region4: #{basic_block_forward.1} parent=0 // loop_header_branch
    %18 = sbr.rel (%p16) target = $region8
  $region5: #{basic_block_forward.1} parent=0 // loop_body
    %s20 = ssub.s32 %s15, 1
    %s21 = ssub.s32 %s15, 2
    %s22 = sadd.s32 %s15, 1
    %s23 = ssub.s32 %s15, %s22
    %p24 = scmp.eq.s32.totalorder %s23, 0
    %s26 = sadd.s32 %s25, 1
    %s27 = scalar_select %p24, %s25, %s26
    %p30 = pneg %p24
    %p31 = scmp.eq.s32.totalorder %s15, 1
    %p32 = por %p30, %p31
    %p33 = scmp.ne.s32.totalorder %s25, %s28
    %p34 = scmp.eq.s32.totalorder %s15, 0
    %p35 = por %p33, %p34
    %p36 = scmp.ne.s32.totalorder %s25, %s28
    %p37 = scmp.eq.s32.totalorder %s20, 1
    %p38 = por %p36, %p37
    %p39 = scmp.ne.s32.totalorder %s28, %s29
    %p40 = scmp.eq.s32.totalorder %s20, 0
    %p41 = por %p39, %p40
    %p42 = scmp.ne.s32.totalorder %s28, %s29
    %p43 = scmp.eq.s32.totalorder %s21, 1
    %p44 = por %p42, %p43
    %p46 = scmp.ne.s32.totalorder %s29, %s45
    %p47 = scmp.eq.s32.totalorder %s21, 0
    %p48 = por %p46, %p47
    %s50 = sadd.s32 %s49, 1
    %p53 = scmp.eq.s32.totalorder %s15, 1
    %p54 = scmp.ne.s32.totalorder %s49, %s51
    %p55 = scmp.eq.s32.totalorder %s15, 0
    %p56 = por %p54, %p55
    %p57 = scmp.ne.s32.totalorder %s49, %s51
    %p58 = scmp.eq.s32.totalorder %s20, 1
    %p59 = por %p57, %p58
    %p60 = scmp.ne.s32.totalorder %s51, %s52
    %p61 = scmp.eq.s32.totalorder %s20, 0
    %p62 = por %p60, %p61
    %p63 = scmp.ne.s32.totalorder %s51, %s52
    %p64 = scmp.eq.s32.totalorder %s21, 1
    %p65 = por %p63, %p64
    %p67 = scmp.ne.s32.totalorder %s52, %s66
    %p68 = scmp.eq.s32.totalorder %s21, 0
    %p69 = por %p67, %p68
    %s71 = sadd.s32 %s70, 1
    %p74 = scmp.eq.s32.totalorder %s15, 1
    %p75 = scmp.ne.s32.totalorder %s70, %s72
    %p76 = scmp.eq.s32.totalorder %s15, 0
    %p77 = por %p75, %p76
    %p78 = scmp.ne.s32.totalorder %s70, %s72
    %p79 = scmp.eq.s32.totalorder %s20, 1
    %p80 = por %p78, %p79
    %p81 = scmp.ne.s32.totalorder %s72, %s73
    %p82 = scmp.eq.s32.totalorder %s20, 0
    %p83 = por %p81, %p82
    %p84 = scmp.ne.s32.totalorder %s72, %s73
    %p85 = scmp.eq.s32.totalorder %s21, 1
    %p86 = por %p84, %p85
    %p88 = scmp.ne.s32.totalorder %s73, %s87
    %p89 = scmp.eq.s32.totalorder %s21, 0
    %p90 = por %p88, %p89
    %s92 = sadd.s32 %s91, 1
    %p95 = scmp.eq.s32.totalorder %s15, 1
    %p96 = scmp.ne.s32.totalorder %s91, %s93
    %p97 = scmp.eq.s32.totalorder %s15, 0
    %p98 = por %p96, %p97
    %p99 = scmp.ne.s32.totalorder %s91, %s93
    %p100 = scmp.eq.s32.totalorder %s20, 1
    %p101 = por %p99, %p100
    %p102 = scmp.ne.s32.totalorder %s93, %s94
    %p103 = scmp.eq.s32.totalorder %s20, 0
    %p104 = por %p102, %p103
    %p105 = scmp.ne.s32.totalorder %s93, %s94
    %p106 = scmp.eq.s32.totalorder %s21, 1
    %p107 = por %p105, %p106
    %p109 = scmp.ne.s32.totalorder %s94, %s108
    %p110 = scmp.eq.s32.totalorder %s21, 0
    %p111 = por %p109, %p110
    %s113 = sadd.s32 %s112, 1
    %p116 = scmp.eq.s32.totalorder %s15, 1
    %p117 = scmp.ne.s32.totalorder %s112, %s114
    %p118 = scmp.eq.s32.totalorder %s15, 0
    %p119 = por %p117, %p118
    %p120 = scmp.ne.s32.totalorder %s112, %s114
    %p121 = scmp.eq.s32.totalorder %s20, 1
    %p122 = por %p120, %p121
    %p123 = scmp.ne.s32.totalorder %s114, %s115
    %p124 = scmp.eq.s32.totalorder %s20, 0
    %p125 = por %p123, %p124
    %p126 = scmp.ne.s32.totalorder %s114, %s115
    %p127 = scmp.eq.s32.totalorder %s21, 1
    %p128 = por %p126, %p127
    %p130 = scmp.ne.s32.totalorder %s115, %s129
    %p131 = scmp.eq.s32.totalorder %s21, 0
    %p132 = por %p130, %p131
    %s134 = sadd.s32 %s133, 1
    %p137 = scmp.eq.s32.totalorder %s15, 1
    %p138 = scmp.ne.s32.totalorder %s133, %s135
    %p139 = scmp.eq.s32.totalorder %s15, 0
    %p140 = por %p138, %p139
    %p141 = scmp.ne.s32.totalorder %s133, %s135
    %p142 = scmp.eq.s32.totalorder %s20, 1
    %p143 = por %p141, %p142
    %p144 = scmp.ne.s32.totalorder %s135, %s136
    %p145 = scmp.eq.s32.totalorder %s20, 0
    %p146 = por %p144, %p145
    %p147 = scmp.ne.s32.totalorder %s135, %s136
    %p148 = scmp.eq.s32.totalorder %s21, 1
    %p149 = por %p147, %p148
    %p151 = scmp.ne.s32.totalorder %s136, %s150
    %p152 = scmp.eq.s32.totalorder %s21, 0
    %p153 = por %p151, %p152
    %s155 = sadd.s32 %s154, 1
    %p158 = scmp.eq.s32.totalorder %s15, 1
    %p159 = scmp.ne.s32.totalorder %s154, %s156
    %p160 = scmp.eq.s32.totalorder %s15, 0
    %p161 = por %p159, %p160
    %p162 = scmp.ne.s32.totalorder %s154, %s156
    %p163 = scmp.eq.s32.totalorder %s20, 1
    %p164 = por %p162, %p163
    %p165 = scmp.ne.s32.totalorder %s156, %s157
    %p166 = scmp.eq.s32.totalorder %s20, 0
    %p167 = por %p165, %p166
    %p168 = scmp.ne.s32.totalorder %s156, %s157
    %p169 = scmp.eq.s32.totalorder %s21, 1
    %p170 = por %p168, %p169
    %p172 = scmp.ne.s32.totalorder %s157, %s171
    %p173 = scmp.eq.s32.totalorder %s21, 0
    %p174 = por %p172, %p173
    %s175 = ssub.s32 %s15, %s22
    %p176 = scmp.eq.s32.totalorder %s175, 0
    %s178 = sadd.s32 %s177, 1
    %s179 = scalar_select %p176, %s177, %s178
    %p182 = pneg %p176
    %p183 = scmp.eq.s32.totalorder %s15, 1
    %p184 = por %p182, %p183
    %p185 = scmp.ne.s32.totalorder %s177, %s180
    %p186 = scmp.eq.s32.totalorder %s15, 0
    %p187 = por %p185, %p186
    %p188 = scmp.ne.s32.totalorder %s177, %s180
    %p189 = scmp.eq.s32.totalorder %s20, 1
    %p190 = por %p188, %p189
    %p191 = scmp.ne.s32.totalorder %s180, %s181
    %p192 = scmp.eq.s32.totalorder %s20, 0
    %p193 = por %p191, %p192
    %p194 = scmp.ne.s32.totalorder %s180, %s181
    %p195 = scmp.eq.s32.totalorder %s21, 1
    %p196 = por %p194, %p195
    %p198 = scmp.ne.s32.totalorder %s181, %s197
    %p199 = scmp.eq.s32.totalorder %s21, 0
    %p200 = por %p198, %p199
    %s201 = ssub.s32 %s15, %s22
    %p202 = scmp.eq.s32.totalorder %s201, 0
    %s204 = sadd.s32 %s203, 1
    %s205 = scalar_select %p202, %s203, %s204
    %p208 = pneg %p202
    %p209 = scmp.eq.s32.totalorder %s15, 1
    %p210 = por %p208, %p209
    %p211 = scmp.ne.s32.totalorder %s203, %s206
    %p212 = scmp.eq.s32.totalorder %s15, 0
    %p213 = por %p211, %p212
    %p214 = scmp.ne.s32.totalorder %s203, %s206
    %p215 = scmp.eq.s32.totalorder %s20, 1
    %p216 = por %p214, %p215
    %p217 = scmp.ne.s32.totalorder %s206, %s207
    %p218 = scmp.eq.s32.totalorder %s20, 0
    %p219 = por %p217, %p218
    %p220 = scmp.ne.s32.totalorder %s206, %s207
    %p221 = scmp.eq.s32.totalorder %s21, 1
    %p222 = por %p220, %p221
    %p224 = scmp.ne.s32.totalorder %s207, %s223
    %p225 = scmp.eq.s32.totalorder %s21, 0
    %p226 = por %p224, %p225
    %p227 = scmp.le.s32.totalorder 1, %s15
    %p228 = scmp.lt.s32.totalorder %s15, 3
    %p229 = pnand %p227, %p228
    %p230 = pneg %p229
    // Predicated region
    $region9: #{basic_block_forward.1} parent=5 // pred_check
      _
    $region10: #{basic_block_forward.1} parent=5 // pred_check_branch
      %232 = sbr.rel (%p229) target = $region12
    $region11: #{basic_block_forward.1} parent=5 // pred_region
      %s233 = ssub.s32 %s15, 1
      // Predicated region
      $region13: #{basic_block_forward.1} parent=11 // pred_check
        %p234 = pneg %p62
      $region14: #{basic_block_forward.1} parent=11 // pred_check_branch
        %236 = sbr.rel (%p234) target = $region16
      $region15: #{basic_block_forward.1} parent=11 // pred_region
        _
      $region16: #{basic_block_forward.1} parent=11 // pred_fallthru
        _
      // Predicated region
      $region17: #{basic_block_forward.1} parent=11 // pred_check
        %p237 = pneg %p83
      $region18: #{basic_block_forward.1} parent=11 // pred_check_branch
        %239 = sbr.rel (%p237) target = $region20
      $region19: #{basic_block_forward.1} parent=11 // pred_region
        _
      $region20: #{basic_block_forward.1} parent=11 // pred_fallthru
        _
      // Predicated region
      $region21: #{basic_block_forward.1} parent=11 // pred_check
        %p240 = pneg %p104
      $region22: #{basic_block_forward.1} parent=11 // pred_check_branch
        %242 = sbr.rel (%p240) target = $region24
      $region23: #{basic_block_forward.1} parent=11 // pred_region
        _
      $region24: #{basic_block_forward.1} parent=11 // pred_fallthru
        _
      // Predicated region
      $region25: #{basic_block_forward.1} parent=11 // pred_check
        %p243 = pneg %p125
      $region26: #{basic_block_forward.1} parent=11 // pred_check_branch
        %245 = sbr.rel (%p243) target = $region28
      $region27: #{basic_block_forward.1} parent=11 // pred_region
        _
      $region28: #{basic_block_forward.1} parent=11 // pred_fallthru
        _
      // Predicated region
      $region29: #{basic_block_forward.1} parent=11 // pred_check
        %p246 = pneg %p146
      $region30: #{basic_block_forward.1} parent=11 // pred_check_branch
        %248 = sbr.rel (%p246) target = $region32
      $region31: #{basic_block_forward.1} parent=11 // pred_region
        _
      $region32: #{basic_block_forward.1} parent=11 // pred_fallthru
        _
      // Predicated region
      $region33: #{basic_block_forward.1} parent=11 // pred_check
        %p249 = pneg %p167
      $region34: #{basic_block_forward.1} parent=11 // pred_check_branch
        %251 = sbr.rel (%p249) target = $region36
      $region35: #{basic_block_forward.1} parent=11 // pred_region
        _
      $region36: #{basic_block_forward.1} parent=11 // pred_fallthru
        _
    $region12: #{basic_block_forward.1} parent=5 // pred_fallthru
      _
    %p252 = scmp.lt.s32.totalorder %s15, 2
    // Predicated region
    $region37: #{basic_block_forward.1} parent=5 // pred_check
      %p253 = pneg %p252
    $region38: #{basic_block_forward.1} parent=5 // pred_check_branch
      %255 = sbr.rel (%p253) target = $region40
    $region39: #{basic_block_forward.1} parent=5 // pred_region
      // Predicated region
      $region41: #{basic_block_forward.1} parent=39 // pred_check
        %p256 = pneg %p35
      $region42: #{basic_block_forward.1} parent=39 // pred_check_branch
        %258 = sbr.rel (%p256) target = $region44
      $region43: #{basic_block_forward.1} parent=39 // pred_region
        %p259 = scmp.lt.s32.totalorder %s15, 1
        %s260 = scalar_select %p259, %s15, 1
        %s261 = smul.addr %s260, 8
        %s262 = smul.addr %s261, 8
        %s263 = scalar_lea.vmem %s0, %s262
      $region44: #{basic_block_forward.1} parent=39 // pred_fallthru
        _
    $region40: #{basic_block_forward.1} parent=5 // pred_fallthru
      _
    %p264 = scmp.le.s32.totalorder 1, %s15
    %p265 = scmp.lt.s32.totalorder %s15, 3
    %p266 = pnand %p264, %p265
    %p267 = pneg %p266
    // Predicated region
    $region45: #{basic_block_forward.1} parent=5 // pred_check
      _
    $region46: #{basic_block_forward.1} parent=5 // pred_check_branch
      %269 = sbr.rel (%p266) target = $region48
    $region47: #{basic_block_forward.1} parent=5 // pred_region
      %s270 = ssub.s32 %s15, 1
      %p271 = scmp.lt.s32.totalorder %s20, 1
      %s272 = scalar_select %p271, %s20, 1
      %s273 = smul.addr %s272, 8
      %s274 = smul.addr %s273, 8
      %s275 = scalar_lea.vmem %s0, %s274
      %p276 = pneg %p41
      %p277 = pneg %p38
      %p278 = pneg %p62
      %p279 = pneg %p59
      %p280 = pneg %p83
      %p281 = pneg %p80
      %p282 = pneg %p104
      %p283 = pneg %p101
      %p284 = pneg %p125
      %p285 = pneg %p122
      %p286 = pneg %p146
      %p287 = pneg %p143
      %p288 = pneg %p167
      %p289 = pneg %p164
      %p290 = pneg %p193
      %p291 = pneg %p190
      %p292 = scmp.lt.s32.totalorder %s20, 1
      %s293 = scalar_select %p292, %s20, 1
      %s294 = smul.addr %s293, 8
      %s295 = smul.addr %s294, 8
      %s296 = scalar_lea.vmem %s7, %s295
      %p297 = pneg %p219
      %p298 = pneg %p216
      %p299 = scmp.lt.s32.totalorder %s20, 1
      %s300 = scalar_select %p299, %s20, 1
      %s301 = smul.addr %s300, 8
      %s302 = smul.addr %s301, 8
      %s303 = scalar_lea.vmem %s8, %s302
      %p304 = scmp.lt.s32.totalorder %s20, 1
      %s305 = scalar_select %p304, %s20, 1
      %s306 = smul.addr %s305, 8
      %s307 = smul.addr %s306, 8
      %s308 = scalar_lea.vmem %s0, %s307
      %p309 = scmp.lt.s32.totalorder %s20, 1
      %s310 = scalar_select %p309, %s20, 1
      %s311 = smul.addr %s310, 8
      %s312 = smul.addr %s311, 8
      %s313 = scalar_lea.vmem %s7, %s312
      %p314 = scmp.lt.s32.totalorder %s20, 1
      %s315 = scalar_select %p314, %s20, 1
      %s316 = smul.addr %s315, 8
      %s317 = smul.addr %s316, 8
      %s318 = scalar_lea.vmem %s8, %s317
      %v320 = vld [vmem:[%s308] sm:$0xff]
      %v321 = vld [vmem:[%s308 + $0x8] sm:$0xff]
      %v322 = vld [vmem:[%s308 + $0x10] sm:$0xff]
      %v323 = vld [vmem:[%s308 + $0x18] sm:$0xff]
      %v324 = vld [vmem:[%s308 + $0x20] sm:$0xff]
      %v325 = vld [vmem:[%s308 + $0x28] sm:$0xff]
      %v326 = vld [vmem:[%s308 + $0x30] sm:$0xff]
      %v327 = vld [vmem:[%s308 + $0x38] sm:$0xff]
      %v328 = vpack.c.bf16 %v320, %v320
      %v329 = vpack.c.bf16 %v321, %v321
      %v330 = vpack.c.bf16 %v322, %v322
      %v331 = vpack.c.bf16 %v323, %v323
      %v332 = vpack.c.bf16 %v324, %v324
      %v333 = vpack.c.bf16 %v325, %v325
      %v334 = vpack.c.bf16 %v326, %v326
      %v335 = vpack.c.bf16 %v327, %v327
      %v337 = vshrl.u32 %v328, 16
      %v339 = vrot.slane %v337, 7
      %v340 = vshll.u32 %v328, 16
      %v342 = vor.u32 %v339, %v340
      %v344 = vshrl.u32 %v329, 16
      %v346 = vrot.slane %v344, 7
      %v347 = vshll.u32 %v329, 16
      %v349 = vor.u32 %v346, %v347
      %v351 = vshrl.u32 %v330, 16
      %v353 = vrot.slane %v351, 7
      %v354 = vshll.u32 %v330, 16
      %v356 = vor.u32 %v353, %v354
      %v358 = vshrl.u32 %v331, 16
      %v360 = vrot.slane %v358, 7
      %v361 = vshll.u32 %v331, 16
      %v363 = vor.u32 %v360, %v361
      %v365 = vshrl.u32 %v332, 16
      %v367 = vrot.slane %v365, 7
      %v368 = vshll.u32 %v332, 16
      %v370 = vor.u32 %v367, %v368
      %v372 = vshrl.u32 %v333, 16
      %v374 = vrot.slane %v372, 7
      %v375 = vshll.u32 %v333, 16
      %v377 = vor.u32 %v374, %v375
      %v379 = vshrl.u32 %v334, 16
      %v381 = vrot.slane %v379, 7
      %v382 = vshll.u32 %v334, 16
      %v384 = vor.u32 %v381, %v382
      %v386 = vshrl.u32 %v335, 16
      %v388 = vrot.slane %v386, 7
      %v389 = vshll.u32 %v335, 16
      %v391 = vor.u32 %v388, %v389
      %vm400 = vcmask 1040384
      %vm401 = vsmask.f32 256
      %vm402 = vmand %vm400, %vm401
      %v403 = vsel %vm402, 0, %v342
      %v404 = vsel %vm402, 0, %v349
      %v405 = vsel %vm402, 0, %v356
      %v406 = vsel %vm402, 0, %v363
      %v407 = vsel %vm402, 0, %v370
      %v408 = vsel %vm402, 0, %v377
      %v409 = vsel %vm402, 0, %v384
      %v410 = vsel %vm402, 0, %v391
      %v412 = vshrl.u32 0, 16
      %v414 = vshll.u32 0, 16
      %v416 = vrot.slane %v414, 1
      %v417 = vor.u32 %v412, %v416
      %v419 = vshrl.u32 %v403, 16
      %v421 = vshll.u32 %v403, 16
      %v423 = vrot.slane %v421, 1
      %v424 = vor.u32 %v419, %v423
      %v426 = vshrl.u32 %v404, 16
      %v428 = vshll.u32 %v404, 16
      %v430 = vrot.slane %v428, 1
      %v431 = vor.u32 %v426, %v430
      %v433 = vshrl.u32 %v405, 16
      %v435 = vshll.u32 %v405, 16
      %v437 = vrot.slane %v435, 1
      %v438 = vor.u32 %v433, %v437
      %v440 = vshrl.u32 %v406, 16
      %v442 = vshll.u32 %v406, 16
      %v444 = vrot.slane %v442, 1
      %v445 = vor.u32 %v440, %v444
      %v447 = vshrl.u32 %v407, 16
      %v449 = vshll.u32 %v407, 16
      %v451 = vrot.slane %v449, 1
      %v452 = vor.u32 %v447, %v451
      %v454 = vshrl.u32 %v408, 16
      %v456 = vshll.u32 %v408, 16
      %v458 = vrot.slane %v456, 1
      %v459 = vor.u32 %v454, %v458
      %v461 = vshrl.u32 %v409, 16
      %v463 = vshll.u32 %v409, 16
      %v465 = vrot.slane %v463, 1
      %v466 = vor.u32 %v461, %v465
      %467 = vrot.lane.b32.xlu0 %v417, 16
      %v468 = vpop.permute.xlu0 %467
      %469 = vrot.lane.b32.xlu0 %v424, 16
      %v470 = vpop.permute.xlu0 %469
      %471 = vrot.lane.b32.xlu0 %v431, 16
      %v472 = vpop.permute.xlu0 %471
      %473 = vrot.lane.b32.xlu0 %v438, 16
      %v474 = vpop.permute.xlu0 %473
      %475 = vrot.lane.b32.xlu0 %v445, 16
      %v476 = vpop.permute.xlu0 %475
      %477 = vrot.lane.b32.xlu0 %v452, 16
      %v478 = vpop.permute.xlu0 %477
      %479 = vrot.lane.b32.xlu0 %v459, 16
      %v480 = vpop.permute.xlu0 %479
      %481 = vrot.lane.b32.xlu0 %v466, 16
      %v482 = vpop.permute.xlu0 %481
      %491 = vrot.lane.b32.xlu0 %v403, 32
      %v492 = vpop.permute.xlu0 %491
      %493 = vrot.lane.b32.xlu0 %v404, 32
      %v494 = vpop.permute.xlu0 %493
      %495 = vrot.lane.b32.xlu0 %v405, 32
      %v496 = vpop.permute.xlu0 %495
      %497 = vrot.lane.b32.xlu0 %v406, 32
      %v498 = vpop.permute.xlu0 %497
      %499 = vrot.lane.b32.xlu0 %v407, 32
      %v500 = vpop.permute.xlu0 %499
      %501 = vrot.lane.b32.xlu0 %v408, 32
      %v502 = vpop.permute.xlu0 %501
      %503 = vrot.lane.b32.xlu0 %v409, 32
      %v504 = vpop.permute.xlu0 %503
      %505 = vrot.lane.b32.xlu0 %v410, 32
      %v506 = vpop.permute.xlu0 %505
      %v508 = vshrl.u32 %v410, 16
      %v510 = vshll.u32 %v410, 16
      %v512 = vrot.slane %v510, 1
      %v513 = vor.u32 %v508, %v512
      %514 = vrot.lane.b32.xlu0 %v424, 48
      %v515 = vpop.permute.xlu0 %514
      %516 = vrot.lane.b32.xlu0 %v431, 48
      %v517 = vpop.permute.xlu0 %516
      %518 = vrot.lane.b32.xlu0 %v438, 48
      %v519 = vpop.permute.xlu0 %518
      %520 = vrot.lane.b32.xlu0 %v445, 48
      %v521 = vpop.permute.xlu0 %520
      %522 = vrot.lane.b32.xlu0 %v452, 48
      %v523 = vpop.permute.xlu0 %522
      %524 = vrot.lane.b32.xlu0 %v459, 48
      %v525 = vpop.permute.xlu0 %524
      %526 = vrot.lane.b32.xlu0 %v466, 48
      %v527 = vpop.permute.xlu0 %526
      %528 = vrot.lane.b32.xlu0 %v513, 48
      %v529 = vpop.permute.xlu0 %528
      %vm530 = vcmask 130048
      %v532 = vsel %vm530, 0, %v468
      %v534 = vsel %vm530, %v403, %v470
      %v536 = vsel %vm530, %v404, %v472
      %v538 = vsel %vm530, %v405, %v474
      %v540 = vsel %vm530, %v406, %v476
      %v542 = vsel %vm530, %v407, %v478
      %v544 = vsel %vm530, %v408, %v480
      %v546 = vsel %vm530, %v409, %v482
      %vm547 = vcmask 261120
      %v549 = vsel %vm547, %v532, %v492
      %v551 = vsel %vm547, %v534, %v494
      %v553 = vsel %vm547, %v536, %v496
      %v555 = vsel %vm547, %v538, %v498
      %v557 = vsel %vm547, %v540, %v500
      %v559 = vsel %vm547, %v542, %v502
      %v561 = vsel %vm547, %v544, %v504
      %v563 = vsel %vm547, %v546, %v506
      %vm564 = vcmask 392192
      %v566 = vsel %vm564, %v549, %v515
      %v568 = vsel %vm564, %v551, %v517
      %v570 = vsel %vm564, %v553, %v519
      %v572 = vsel %vm564, %v555, %v521
      %v574 = vsel %vm564, %v557, %v523
      %v576 = vsel %vm564, %v559, %v525
      %v578 = vsel %vm564, %v561, %v527
      %v580 = vsel %vm564, %v563, %v529
      %v581 = vld [vmem:[%s1] sm:$0xf]
      %v582 = vld [vmem:[%s1 + $0x4] sm:$0xf]
      %v583 = vld [vmem:[%s1 + $0x8] sm:$0xf]
      %v584 = vld [vmem:[%s1 + $0xc] sm:$0xf]
      %v585 = vld [vmem:[%s1 + $0x10] sm:$0xf]
      %v586 = vld [vmem:[%s1 + $0x14] sm:$0xf]
      %v587 = vld [vmem:[%s1 + $0x18] sm:$0xf]
      %v588 = vld [vmem:[%s1 + $0x1c] sm:$0xf]
      %v589 = vld [vmem:[%s2] sm:$0x1]
      %v591 = vlaneseq
      %v592 = vshrl.u32 %v591, 7
      %v593 = vsub.s32 0, %v592
      %v594 = vrot.slane %v589, %v593
      %v604 = vunpack.c.l.b16 %v566
      %v605 = vunpack.c.l.b16 %v568
      %v606 = vunpack.c.l.b16 %v570
      %v607 = vunpack.c.l.b16 %v572
      %v608 = vunpack.c.l.b16 %v574
      %v609 = vunpack.c.l.b16 %v576
      %v610 = vunpack.c.l.b16 %v578
      %v611 = vunpack.c.l.b16 %v580
      %v612 = vpack.c.b16 %v605, %v604
      %v613 = vpack.c.b16 %v607, %v606
      %v614 = vpack.c.b16 %v609, %v608
      %v615 = vpack.c.b16 %v611, %v610
      %v624 = vunpack.c.l.b16 %v581
      %v625 = vunpack.c.l.b16 %v582
      %v626 = vunpack.c.l.b16 %v583
      %v627 = vunpack.c.l.b16 %v584
      %v628 = vunpack.c.l.b16 %v585
      %v629 = vunpack.c.l.b16 %v586
      %v630 = vunpack.c.l.b16 %v587
      %v631 = vunpack.c.l.b16 %v588
      %v632 = vpack.c.b16 %v625, %v624
      %v633 = vpack.c.b16 %v627, %v626
      %v634 = vpack.c.b16 %v629, %v628
      %v635 = vpack.c.b16 %v631, %v630
      %vm640 = vcmask 523264
      %v642 = vsel %vm640, %v612, 0
      %v645 = vsel %vm640, %v613, 0
      %v648 = vsel %vm640, %v614, 0
      %v651 = vsel %vm640, %v615, 0
      %653 = vmatprep.subr.bf16.mxu0 0
      %654 = vmatpush1.bf16.msra.mxu0 %v632
      %655 = vmatprep.subr.bf16.mxu0 0
      %656 = vmatpush1.bf16.msra.mxu0 %v633
      %657 = vmatprep.subr.bf16.mxu0 0
      %658 = vmatpush1.bf16.msra.mxu0 %v634
      %659 = vmatprep.subr.bf16.mxu0 0
      %660 = vmatpush1.bf16.msra.mxu0 %v635
      %661 = vmatprep.subr.bf16.mxu0 0
      %662 = vmatpush1.bf16.msra.mxu0 0
      %663 = vmatprep.subr.bf16.mxu0 0
      %664 = vmatpush1.bf16.msra.mxu0 0
      %665 = vmatprep.subr.bf16.mxu0 0
      %666 = vmatpush1.bf16.msra.mxu0 0
      %667 = vmatprep.subr.bf16.mxu0 0
      %668 = vmatpush1.bf16.msra.mxu0 0
      %669 = vmatprep.subr.bf16.mxu0 0
      %670 = vmatpush1.bf16.msra.mxu0 0
      %671 = vmatprep.subr.bf16.mxu0 0
      %672 = vmatpush1.bf16.msra.mxu0 0
      %673 = vmatprep.subr.bf16.mxu0 0
      %674 = vmatpush1.bf16.msra.mxu0 0
      %675 = vmatprep.subr.bf16.mxu0 0
      %676 = vmatpush1.bf16.msra.mxu0 0
      %677 = vmatprep.subr.bf16.mxu0 0
      %678 = vmatpush1.bf16.msra.mxu0 0
      %679 = vmatprep.subr.bf16.mxu0 0
      %680 = vmatpush1.bf16.msra.mxu0 0
      %681 = vmatprep.subr.bf16.mxu0 0
      %682 = vmatpush1.bf16.msra.mxu0 0
      %683 = vmatprep.subr.bf16.mxu0 0
      %684 = vmatpush1.bf16.msra.mxu0 0
      %685 = vmatprep.mubr.bf16.mxu0 0
      %686 = vmatmul.mubr.bf16.gmra.mrb[0].mxu0 %v642
      %v687 = vpop.f32.mrb[0].mxu0
      %v688 = vadd.f32 %v594, %v687
      %v689 = vpop.f32.mrb[0].mxu0
      %v690 = vpop.f32.mrb[0].mxu0
      %v691 = vadd.f32 %v594, %v690
      %v692 = vpop.f32.mrb[0].mxu0
      %693 = vmatprep.mubr.bf16.mxu0 0
      %694 = vmatmul.mubr.bf16.gmra.mrb[0].mxu0 %v645
      %v695 = vpop.f32.mrb[0].mxu0
      %v696 = vadd.f32 %v594, %v695
      %v697 = vpop.f32.mrb[0].mxu0
      %v698 = vpop.f32.mrb[0].mxu0
      %v699 = vadd.f32 %v594, %v698
      %v700 = vpop.f32.mrb[0].mxu0
      %701 = vmatprep.mubr.bf16.mxu0 0
      %702 = vmatmul.mubr.bf16.gmra.mrb[0].mxu0 %v648
      %v703 = vpop.f32.mrb[0].mxu0
      %v704 = vadd.f32 %v594, %v703
      %v705 = vpop.f32.mrb[0].mxu0
      %v706 = vpop.f32.mrb[0].mxu0
      %v707 = vadd.f32 %v594, %v706
      %v708 = vpop.f32.mrb[0].mxu0
      %709 = vmatprep.mubr.bf16.mxu0 0
      %710 = vmatmul.mubr.bf16.gmra.mrb[0].mxu0 %v651
      %v711 = vpop.f32.mrb[0].mxu0
      %v712 = vadd.f32 %v594, %v711
      %v713 = vpop.f32.mrb[0].mxu0
      %v714 = vpop.f32.mrb[0].mxu0
      %v715 = vadd.f32 %v594, %v714
      %v716 = vpop.f32.mrb[0].mxu0
      %717 = vdwg.mxu0
      %v718 = vmax.f32 %v688, 0.0
      %v719 = vmax.f32 %v691, 0.0
      %v720 = vmax.f32 %v696, 0.0
      %v721 = vmax.f32 %v699, 0.0
      %v722 = vmax.f32 %v704, 0.0
      %v723 = vmax.f32 %v707, 0.0
      %v724 = vmax.f32 %v712, 0.0
      %v725 = vmax.f32 %v715, 0.0
      %v726 = vld [vmem:[%s5] sm:$0x3]
      %v727 = vld [vmem:[%s6] sm:$0x1]
      %v729 = vlaneseq
      %v730 = vshrl.u32 %v729, 7
      %v731 = vsub.s32 0, %v730
      %v732 = vrot.slane %v727, %v731
      %v742 = vunpack.c.l.b16 %v328
      %v743 = vunpack.c.l.b16 %v329
      %v744 = vunpack.c.l.b16 %v330
      %v745 = vunpack.c.l.b16 %v331
      %v746 = vunpack.c.l.b16 %v332
      %v747 = vunpack.c.l.b16 %v333
      %v748 = vunpack.c.l.b16 %v334
      %v749 = vunpack.c.l.b16 %v335
      %v750 = vpack.c.b16 %v743, %v742
      %v751 = vpack.c.b16 %v745, %v744
      %v752 = vpack.c.b16 %v747, %v746
      %v753 = vpack.c.b16 %v749, %v748
      %vm754 = vcmask 31744
      %v756 = vsel %vm754, %v750, 0
      %v759 = vsel %vm754, %v751, 0
      %v762 = vsel %vm754, %v752, 0
      %v765 = vsel %vm754, %v753, 0
      %vm767 = vcmask 1041408
      %v769 = vsel %vm767, %v726, 0
      %771 = vmatprep.subr.bf16.mxu0 0
      %772 = vmatpush1.bf16.msra.mxu0 %v769
      %773 = vmatprep.subr.bf16.mxu0 0
      %774 = vmatpush1.bf16.msra.mxu0 0
      %775 = vmatprep.subr.bf16.mxu0 0
      %776 = vmatpush1.bf16.msra.mxu0 0
      %777 = vmatprep.subr.bf16.mxu0 0
      %778 = vmatpush1.bf16.msra.mxu0 0
      %779 = vmatprep.subr.bf16.mxu0 0
      %780 = vmatpush1.bf16.msra.mxu0 0
      %781 = vmatprep.subr.bf16.mxu0 0
      %782 = vmatpush1.bf16.msra.mxu0 0
      %783 = vmatprep.subr.bf16.mxu0 0
      %784 = vmatpush1.bf16.msra.mxu0 0
      %785 = vmatprep.subr.bf16.mxu0 0
      %786 = vmatpush1.bf16.msra.mxu0 0
      %787 = vmatprep.subr.bf16.mxu0 0
      %788 = vmatpush1.bf16.msra.mxu0 0
      %789 = vmatprep.subr.bf16.mxu0 0
      %790 = vmatpush1.bf16.msra.mxu0 0
      %791 = vmatprep.subr.bf16.mxu0 0
      %792 = vmatpush1.bf16.msra.mxu0 0
      %793 = vmatprep.subr.bf16.mxu0 0
      %794 = vmatpush1.bf16.msra.mxu0 0
      %795 = vmatprep.subr.bf16.mxu0 0
      %796 = vmatpush1.bf16.msra.mxu0 0
      %797 = vmatprep.subr.bf16.mxu0 0
      %798 = vmatpush1.bf16.msra.mxu0 0
      %799 = vmatprep.subr.bf16.mxu0 0
      %800 = vmatpush1.bf16.msra.mxu0 0
      %801 = vmatprep.subr.bf16.mxu0 0
      %802 = vmatpush1.bf16.msra.mxu0 0
      %803 = vmatprep.mubr.bf16.mxu0 0
      %804 = vmatmul.mubr.bf16.gmra.mrb[0].mxu0 %v756
      %v805 = vpop.f32.mrb[0].mxu0
      %v806 = vadd.f32 %v732, %v805
      %v807 = vpop.f32.mrb[0].mxu0
      %v808 = vpop.f32.mrb[0].mxu0
      %v809 = vadd.f32 %v732, %v808
      %v810 = vpop.f32.mrb[0].mxu0
      %811 = vmatprep.mubr.bf16.mxu0 0
      %812 = vmatmul.mubr.bf16.gmra.mrb[0].mxu0 %v759
      %v813 = vpop.f32.mrb[0].mxu0
      %v814 = vadd.f32 %v732, %v813
      %v815 = vpop.f32.mrb[0].mxu0
      %v816 = vpop.f32.mrb[0].mxu0
      %v817 = vadd.f32 %v732, %v816
      %v818 = vpop.f32.mrb[0].mxu0
      %819 = vmatprep.mubr.bf16.mxu0 0
      %820 = vmatmul.mubr.bf16.gmra.mrb[0].mxu0 %v762
      %v821 = vpop.f32.mrb[0].mxu0
      %v822 = vadd.f32 %v732, %v821
      %v823 = vpop.f32.mrb[0].mxu0
      %v824 = vpop.f32.mrb[0].mxu0
      %v825 = vadd.f32 %v732, %v824
      %v826 = vpop.f32.mrb[0].mxu0
      %827 = vmatprep.mubr.bf16.mxu0 0
      %828 = vmatmul.mubr.bf16.gmra.mrb[0].mxu0 %v765
      %v829 = vpop.f32.mrb[0].mxu0
      %v830 = vadd.f32 %v732, %v829
      %v831 = vpop.f32.mrb[0].mxu0
      %v832 = vpop.f32.mrb[0].mxu0
      %v833 = vadd.f32 %v732, %v832
      %v834 = vpop.f32.mrb[0].mxu0
      %835 = vdwg.mxu0
      %v836 = vpack.c.bf16 %v718, %v718
      %v837 = vpack.c.bf16 %v719, %v719
      %v838 = vpack.c.bf16 %v720, %v720
      %v839 = vpack.c.bf16 %v721, %v721
      %v840 = vpack.c.bf16 %v722, %v722
      %v841 = vpack.c.bf16 %v723, %v723
      %v842 = vpack.c.bf16 %v724, %v724
      %v843 = vpack.c.bf16 %v725, %v725
      %v845 = vshrl.u32 %v836, 16
      %v847 = vrot.slane %v845, 7
      %v848 = vshll.u32 %v836, 16
      %v850 = vor.u32 %v847, %v848
      %v852 = vshrl.u32 %v837, 16
      %v854 = vrot.slane %v852, 7
      %v855 = vshll.u32 %v837, 16
      %v857 = vor.u32 %v854, %v855
      %v859 = vshrl.u32 %v838, 16
      %v861 = vrot.slane %v859, 7
      %v862 = vshll.u32 %v838, 16
      %v864 = vor.u32 %v861, %v862
      %v866 = vshrl.u32 %v839, 16
      %v868 = vrot.slane %v866, 7
      %v869 = vshll.u32 %v839, 16
      %v871 = vor.u32 %v868, %v869
      %v873 = vshrl.u32 %v840, 16
      %v875 = vrot.slane %v873, 7
      %v876 = vshll.u32 %v840, 16
      %v878 = vor.u32 %v875, %v876
      %v880 = vshrl.u32 %v841, 16
      %v882 = vrot.slane %v880, 7
      %v883 = vshll.u32 %v841, 16
      %v885 = vor.u32 %v882, %v883
      %v887 = vshrl.u32 %v842, 16
      %v889 = vrot.slane %v887, 7
      %v890 = vshll.u32 %v842, 16
      %v892 = vor.u32 %v889, %v890
      %v894 = vshrl.u32 %v843, 16
      %v896 = vrot.slane %v894, 7
      %v897 = vshll.u32 %v843, 16
      %v899 = vor.u32 %v896, %v897
      %v908 = vsel %vm402, 0, %v850
      %v909 = vsel %vm402, 0, %v857
      %v910 = vsel %vm402, 0, %v864
      %v911 = vsel %vm402, 0, %v871
      %v912 = vsel %vm402, 0, %v878
      %v913 = vsel %vm402, 0, %v885
      %v914 = vsel %vm402, 0, %v892
      %v915 = vsel %vm402, 0, %v899
      %vm916 = vcmask 1044480
      %vm917 = vsmask.f32 4352
      %vm918 = vmand %vm916, %vm917
      %v919 = vsel %vm918, %v908, 0
      %v920 = vsel %vm918, %v909, 0
      %v921 = vsel %vm918, %v910, 0
      %v922 = vsel %vm918, %v911, 0
      %v923 = vsel %vm918, %v912, 0
      %v924 = vsel %vm918, %v913, 0
      %v925 = vsel %vm918, %v914, 0
      %v926 = vsel %vm918, %v915, 0
      %v928 = vshrl.u32 %v919, 16
      %v930 = vshll.u32 %v919, 16
      %v932 = vrot.slane %v930, 1
      %v933 = vor.u32 %v928, %v932
      %v935 = vshrl.u32 %v920, 16
      %v937 = vshll.u32 %v920, 16
      %v939 = vrot.slane %v937, 1
      %v940 = vor.u32 %v935, %v939
      %v942 = vshrl.u32 %v921, 16
      %v944 = vshll.u32 %v921, 16
      %v946 = vrot.slane %v944, 1
      %v947 = vor.u32 %v942, %v946
      %v949 = vshrl.u32 %v922, 16
      %v951 = vshll.u32 %v922, 16
      %v953 = vrot.slane %v951, 1
      %v954 = vor.u32 %v949, %v953
      %v956 = vshrl.u32 %v923, 16
      %v958 = vshll.u32 %v923, 16
      %v960 = vrot.slane %v958, 1
      %v961 = vor.u32 %v956, %v960
      %v963 = vshrl.u32 %v924, 16
      %v965 = vshll.u32 %v924, 16
      %v967 = vrot.slane %v965, 1
      %v968 = vor.u32 %v963, %v967
      %v970 = vshrl.u32 %v925, 16
      %v972 = vshll.u32 %v925, 16
      %v974 = vrot.slane %v972, 1
      %v975 = vor.u32 %v970, %v974
      %976 = vrot.lane.b32.xlu0 %v417, 8
      %v977 = vpop.permute.xlu0 %976
      %978 = vrot.lane.b32.xlu0 %v933, 8
      %v979 = vpop.permute.xlu0 %978
      %980 = vrot.lane.b32.xlu0 %v940, 8
      %v981 = vpop.permute.xlu0 %980
      %982 = vrot.lane.b32.xlu0 %v947, 8
      %v983 = vpop.permute.xlu0 %982
      %984 = vrot.lane.b32.xlu0 %v954, 8
      %v985 = vpop.permute.xlu0 %984
      %986 = vrot.lane.b32.xlu0 %v961, 8
      %v987 = vpop.permute.xlu0 %986
      %988 = vrot.lane.b32.xlu0 %v968, 8
      %v989 = vpop.permute.xlu0 %988
      %990 = vrot.lane.b32.xlu0 %v975, 8
      %v991 = vpop.permute.xlu0 %990
      %v1000 = vrot.slane 0, 1
      %v1001 = vrot.slane %v919, 1
      %v1002 = vrot.slane %v920, 1
      %v1003 = vrot.slane %v921, 1
      %v1004 = vrot.slane %v922, 1
      %v1005 = vrot.slane %v923, 1
      %v1006 = vrot.slane %v924, 1
      %v1007 = vrot.slane %v925, 1
      %1008 = vrot.lane.b32.xlu0 %v1000, 16
      %v1009 = vpop.permute.xlu0 %1008
      %1010 = vrot.lane.b32.xlu0 %v1001, 16
      %v1011 = vpop.permute.xlu0 %1010
      %1012 = vrot.lane.b32.xlu0 %v1002, 16
      %v1013 = vpop.permute.xlu0 %1012
      %1014 = vrot.lane.b32.xlu0 %v1003, 16
      %v1015 = vpop.permute.xlu0 %1014
      %1016 = vrot.lane.b32.xlu0 %v1004, 16
      %v1017 = vpop.permute.xlu0 %1016
      %1018 = vrot.lane.b32.xlu0 %v1005, 16
      %v1019 = vpop.permute.xlu0 %1018
      %1020 = vrot.lane.b32.xlu0 %v1006, 16
      %v1021 = vpop.permute.xlu0 %1020
      %1022 = vrot.lane.b32.xlu0 %v1007, 16
      %v1023 = vpop.permute.xlu0 %1022
      %1025 = vrot.lane.b32.xlu0 %v919, 24
      %v1026 = vpop.permute.xlu0 %1025
      %1027 = vrot.lane.b32.xlu0 %v920, 24
      %v1028 = vpop.permute.xlu0 %1027
      %1029 = vrot.lane.b32.xlu0 %v921, 24
      %v1030 = vpop.permute.xlu0 %1029
      %1031 = vrot.lane.b32.xlu0 %v922, 24
      %v1032 = vpop.permute.xlu0 %1031
      %1033 = vrot.lane.b32.xlu0 %v923, 24
      %v1034 = vpop.permute.xlu0 %1033
      %1035 = vrot.lane.b32.xlu0 %v924, 24
      %v1036 = vpop.permute.xlu0 %1035
      %1037 = vrot.lane.b32.xlu0 %v925, 24
      %v1038 = vpop.permute.xlu0 %1037
      %1039 = vrot.lane.b32.xlu0 %v926, 24
      %v1040 = vpop.permute.xlu0 %1039
      %v1042 = vshrl.u32 %v926, 16
      %v1044 = vshll.u32 %v926, 16
      %v1046 = vrot.slane %v1044, 1
      %v1047 = vor.u32 %v1042, %v1046
      %1048 = vrot.lane.b32.xlu0 %v933, 32
      %v1049 = vpop.permute.xlu0 %1048
      %1050 = vrot.lane.b32.xlu0 %v940, 32
      %v1051 = vpop.permute.xlu0 %1050
      %1052 = vrot.lane.b32.xlu0 %v947, 32
      %v1053 = vpop.permute.xlu0 %1052
      %1054 = vrot.lane.b32.xlu0 %v954, 32
      %v1055 = vpop.permute.xlu0 %1054
      %1056 = vrot.lane.b32.xlu0 %v961, 32
      %v1057 = vpop.permute.xlu0 %1056
      %1058 = vrot.lane.b32.xlu0 %v968, 32
      %v1059 = vpop.permute.xlu0 %1058
      %1060 = vrot.lane.b32.xlu0 %v975, 32
      %v1061 = vpop.permute.xlu0 %1060
      %1062 = vrot.lane.b32.xlu0 %v1047, 32
      %v1063 = vpop.permute.xlu0 %1062
      %v1064 = vrot.slane %v926, 1
      %1065 = vrot.lane.b32.xlu0 %v1001, 40
      %v1066 = vpop.permute.xlu0 %1065
      %1067 = vrot.lane.b32.xlu0 %v1002, 40
      %v1068 = vpop.permute.xlu0 %1067
      %1069 = vrot.lane.b32.xlu0 %v1003, 40
      %v1070 = vpop.permute.xlu0 %1069
      %1071 = vrot.lane.b32.xlu0 %v1004, 40
      %v1072 = vpop.permute.xlu0 %1071
      %1073 = vrot.lane.b32.xlu0 %v1005, 40
      %v1074 = vpop.permute.xlu0 %1073
      %1075 = vrot.lane.b32.xlu0 %v1006, 40
      %v1076 = vpop.permute.xlu0 %1075
      %1077 = vrot.lane.b32.xlu0 %v1007, 40
      %v1078 = vpop.permute.xlu0 %1077
      %1079 = vrot.lane.b32.xlu0 %v1064, 40
      %v1080 = vpop.permute.xlu0 %1079
      %1081 = vrot.lane.b32.xlu0 %v920, 48
      %v1082 = vpop.permute.xlu0 %1081
      %1083 = vrot.lane.b32.xlu0 %v921, 48
      %v1084 = vpop.permute.xlu0 %1083
      %1085 = vrot.lane.b32.xlu0 %v922, 48
      %v1086 = vpop.permute.xlu0 %1085
      %1087 = vrot.lane.b32.xlu0 %v923, 48
      %v1088 = vpop.permute.xlu0 %1087
      %1089 = vrot.lane.b32.xlu0 %v924, 48
      %v1090 = vpop.permute.xlu0 %1089
      %1091 = vrot.lane.b32.xlu0 %v925, 48
      %v1092 = vpop.permute.xlu0 %1091
      %1093 = vrot.lane.b32.xlu0 %v926, 48
      %v1094 = vpop.permute.xlu0 %1093
      %1095 = vrot.lane.b32.xlu0 0, 48
      %v1096 = vpop.permute.xlu0 %1095
      %1097 = vrot.lane.b32.xlu0 %v940, 56
      %v1098 = vpop.permute.xlu0 %1097
      %1099 = vrot.lane.b32.xlu0 %v947, 56
      %v1100 = vpop.permute.xlu0 %1099
      %1101 = vrot.lane.b32.xlu0 %v954, 56
      %v1102 = vpop.permute.xlu0 %1101
      %1103 = vrot.lane.b32.xlu0 %v961, 56
      %v1104 = vpop.permute.xlu0 %1103
      %1105 = vrot.lane.b32.xlu0 %v968, 56
      %v1106 = vpop.permute.xlu0 %1105
      %1107 = vrot.lane.b32.xlu0 %v975, 56
      %v1108 = vpop.permute.xlu0 %1107
      %1109 = vrot.lane.b32.xlu0 %v1047, 56
      %v1110 = vpop.permute.xlu0 %1109
      %1111 = vrot.lane.b32.xlu0 %v417, 56
      %v1112 = vpop.permute.xlu0 %1111
      %1113 = vrot.lane.b32.xlu0 %v1002, 64
      %v1114 = vpop.permute.xlu0 %1113
      %1115 = vrot.lane.b32.xlu0 %v1003, 64
      %v1116 = vpop.permute.xlu0 %1115
      %1117 = vrot.lane.b32.xlu0 %v1004, 64
      %v1118 = vpop.permute.xlu0 %1117
      %1119 = vrot.lane.b32.xlu0 %v1005, 64
      %v1120 = vpop.permute.xlu0 %1119
      %1121 = vrot.lane.b32.xlu0 %v1006, 64
      %v1122 = vpop.permute.xlu0 %1121
      %1123 = vrot.lane.b32.xlu0 %v1007, 64
      %v1124 = vpop.permute.xlu0 %1123
      %1125 = vrot.lane.b32.xlu0 %v1064, 64
      %v1126 = vpop.permute.xlu0 %1125
      %1127 = vrot.lane.b32.xlu0 %v1000, 64
      %v1128 = vpop.permute.xlu0 %1127
      %vm1129 = vcmask 64512
      %v1131 = vsel %vm1129, 0, %v977
      %v1133 = vsel %vm1129, %v919, %v979
      %v1135 = vsel %vm1129, %v920, %v981
      %v1137 = vsel %vm1129, %v921, %v983
      %v1139 = vsel %vm1129, %v922, %v985
      %v1141 = vsel %vm1129, %v923, %v987
      %v1143 = vsel %vm1129, %v924, %v989
      %v1145 = vsel %vm1129, %v925, %v991
      %v1147 = vsel %vm530, %v1131, %v1009
      %v1149 = vsel %vm530, %v1133, %v1011
      %v1151 = vsel %vm530, %v1135, %v1013
      %v1153 = vsel %vm530, %v1137, %v1015
      %v1155 = vsel %vm530, %v1139, %v1017
      %v1157 = vsel %vm530, %v1141, %v1019
      %v1159 = vsel %vm530, %v1143, %v1021
      %v1161 = vsel %vm530, %v1145, %v1023
      %vm1162 = vcmask 195584
      %v1164 = vsel %vm1162, %v1147, %v1026
      %v1166 = vsel %vm1162, %v1149, %v1028
      %v1168 = vsel %vm1162, %v1151, %v1030
      %v1170 = vsel %vm1162, %v1153, %v1032
      %v1172 = vsel %vm1162, %v1155, %v1034
      %v1174 = vsel %vm1162, %v1157, %v1036
      %v1176 = vsel %vm1162, %v1159, %v1038
      %v1178 = vsel %vm1162, %v1161, %v1040
      %v1180 = vsel %vm547, %v1164, %v1049
      %v1182 = vsel %vm547, %v1166, %v1051
      %v1184 = vsel %vm547, %v1168, %v1053
      %v1186 = vsel %vm547, %v1170, %v1055
      %v1188 = vsel %vm547, %v1172, %v1057
      %v1190 = vsel %vm547, %v1174, %v1059
      %v1192 = vsel %vm547, %v1176, %v1061
      %v1194 = vsel %vm547, %v1178, %v1063
      %vm1195 = vcmask 326656
      %v1197 = vsel %vm1195, %v1180, %v1066
      %v1199 = vsel %vm1195, %v1182, %v1068
      %v1201 = vsel %vm1195, %v1184, %v1070
      %v1203 = vsel %vm1195, %v1186, %v1072
      %v1205 = vsel %vm1195, %v1188, %v1074
      %v1207 = vsel %vm1195, %v1190, %v1076
      %v1209 = vsel %vm1195, %v1192, %v1078
      %v1211 = vsel %vm1195, %v1194, %v1080
      %v1213 = vsel %vm564, %v1197, %v1082
      %v1215 = vsel %vm564, %v1199, %v1084
      %v1217 = vsel %vm564, %v1201, %v1086
      %v1219 = vsel %vm564, %v1203, %v1088
      %v1221 = vsel %vm564, %v1205, %v1090
      %v1223 = vsel %vm564, %v1207, %v1092
      %v1225 = vsel %vm564, %v1209, %v1094
      %v1227 = vsel %vm564, %v1211, %v1096
      %vm1228 = vcmask 457728
      %v1230 = vsel %vm1228, %v1213, %v1098
      %v1232 = vsel %vm1228, %v1215, %v1100
      %v1234 = vsel %vm1228, %v1217, %v1102
      %v1236 = vsel %vm1228, %v1219, %v1104
      %v1238 = vsel %vm1228, %v1221, %v1106
      %v1240 = vsel %vm1228, %v1223, %v1108
      %v1242 = vsel %vm1228, %v1225, %v1110
      %v1244 = vsel %vm1228, %v1227, %v1112
      %v1246 = vsel %vm640, %v1230, %v1114
      %v1248 = vsel %vm640, %v1232, %v1116
      %v1250 = vsel %vm640, %v1234, %v1118
      %v1252 = vsel %vm640, %v1236, %v1120
      %v1254 = vsel %vm640, %v1238, %v1122
      %v1256 = vsel %vm640, %v1240, %v1124
      %v1258 = vsel %vm640, %v1242, %v1126
      %v1260 = vsel %vm640, %v1244, %v1128
      %v1261 = vld [vmem:[%s3] sm:$0xf]
      %v1262 = vld [vmem:[%s3 + $0x4] sm:$0xf]
      %v1263 = vld [vmem:[%s3 + $0x8] sm:$0xf]
      %v1264 = vld [vmem:[%s3 + $0xc] sm:$0xf]
      %v1265 = vld [vmem:[%s3 + $0x10] sm:$0xf]
      %v1266 = vld [vmem:[%s3 + $0x14] sm:$0xf]
      %v1267 = vld [vmem:[%s3 + $0x18] sm:$0xf]
      %v1268 = vld [vmem:[%s3 + $0x1c] sm:$0xf]
      %v1269 = vld [vmem:[%s3 + $0x20] sm:$0xf]
      %v1270 = vld [vmem:[%s4] sm:$0x1]
      %v1272 = vlaneseq
      %v1273 = vshrl.u32 %v1272, 7
      %v1274 = vsub.s32 0, %v1273
      %v1275 = vrot.slane %v1270, %v1274
      %v1285 = vunpack.c.l.b16 %v1246
      %v1286 = vunpack.c.l.b16 %v1248
      %v1287 = vunpack.c.l.b16 %v1250
      %v1288 = vunpack.c.l.b16 %v1252
      %v1289 = vunpack.c.l.b16 %v1254
      %v1290 = vunpack.c.l.b16 %v1256
      %v1291 = vunpack.c.l.b16 %v1258
      %v1292 = vunpack.c.l.b16 %v1260
      %v1293 = vpack.c.b16 %v1286, %v1285
      %v1294 = vpack.c.b16 %v1288, %v1287
      %v1295 = vpack.c.b16 %v1290, %v1289
      %v1296 = vpack.c.b16 %v1292, %v1291
      %v1306 = vunpack.c.l.b16 %v1261
      %v1307 = vunpack.c.l.b16 %v1262
      %v1308 = vunpack.c.l.b16 %v1263
      %v1309 = vunpack.c.l.b16 %v1264
      %v1310 = vunpack.c.l.b16 %v1265
      %v1311 = vunpack.c.l.b16 %v1266
      %v1312 = vunpack.c.l.b16 %v1267
      %v1313 = vunpack.c.l.b16 %v1268
      %v1314 = vunpack.c.l.b16 %v1269
      %v1315 = vpack.c.b16 %v1307, %v1306
      %v1316 = vpack.c.b16 %v1309, %v1308
      %v1317 = vpack.c.b16 %v1311, %v1310
      %v1318 = vpack.c.b16 %v1313, %v1312
      %v1319 = vpack.c.b16 %v1314, %v1314
      %vm1324 = vcmask 588800
      %v1326 = vsel %vm1324, %v1293, 0
      %v1329 = vsel %vm1324, %v1294, 0
      %v1332 = vsel %vm1324, %v1295, 0
      %v1335 = vsel %vm1324, %v1296, 0
      %vm1337 = vcmask 1043456
      %v1339 = vsel %vm1337, %v1319, 0
      %1341 = vmatprep.subr.bf16.mxu0 0
      %1342 = vmatpush1.bf16.msra.mxu0 %v1315
      %1343 = vmatprep.subr.bf16.mxu0 0
      %1344 = vmatpush1.bf16.msra.mxu0 %v1316
      %1345 = vmatprep.subr.bf16.mxu0 0
      %1346 = vmatpush1.bf16.msra.mxu0 %v1317
      %1347 = vmatprep.subr.bf16.mxu0 0
      %1348 = vmatpush1.bf16.msra.mxu0 %v1318
      %1349 = vmatprep.subr.bf16.mxu0 0
      %1350 = vmatpush1.bf16.msra.mxu0 %v1339
      %1351 = vmatprep.subr.bf16.mxu0 0
      %1352 = vmatpush1.bf16.msra.mxu0 0
      %1353 = vmatprep.subr.bf16.mxu0 0
      %1354 = vmatpush1.bf16.msra.mxu0 0
      %1355 = vmatprep.subr.bf16.mxu0 0
      %1356 = vmatpush1.bf16.msra.mxu0 0
      %1357 = vmatprep.subr.bf16.mxu0 0
      %1358 = vmatpush1.bf16.msra.mxu0 0
      %1359 = vmatprep.subr.bf16.mxu0 0
      %1360 = vmatpush1.bf16.msra.mxu0 0
      %1361 = vmatprep.subr.bf16.mxu0 0
      %1362 = vmatpush1.bf16.msra.mxu0 0
      %1363 = vmatprep.subr.bf16.mxu0 0
      %1364 = vmatpush1.bf16.msra.mxu0 0
      %1365 = vmatprep.subr.bf16.mxu0 0
      %1366 = vmatpush1.bf16.msra.mxu0 0
      %1367 = vmatprep.subr.bf16.mxu0 0
      %1368 = vmatpush1.bf16.msra.mxu0 0
      %1369 = vmatprep.subr.bf16.mxu0 0
      %1370 = vmatpush1.bf16.msra.mxu0 0
      %1371 = vmatprep.subr.bf16.mxu0 0
      %1372 = vmatpush1.bf16.msra.mxu0 0
      %1373 = vmatprep.mubr.bf16.mxu0 0
      %1374 = vmatmul.mubr.bf16.gmra.mrb[0].mxu0 %v1326
      %v1375 = vpop.f32.mrb[0].mxu0
      %v1376 = vadd.f32 %v1275, %v1375
      %v1377 = vpop.f32.mrb[0].mxu0
      %v1378 = vpop.f32.mrb[0].mxu0
      %v1379 = vadd.f32 %v1275, %v1378
      %v1380 = vpop.f32.mrb[0].mxu0
      %1381 = vmatprep.mubr.bf16.mxu0 0
      %1382 = vmatmul.mubr.bf16.gmra.mrb[0].mxu0 %v1329
      %v1383 = vpop.f32.mrb[0].mxu0
      %v1384 = vadd.f32 %v1275, %v1383
      %v1385 = vpop.f32.mrb[0].mxu0
      %v1386 = vpop.f32.mrb[0].mxu0
      %v1387 = vadd.f32 %v1275, %v1386
      %v1388 = vpop.f32.mrb[0].mxu0
      %1389 = vmatprep.mubr.bf16.mxu0 0
      %1390 = vmatmul.mubr.bf16.gmra.mrb[0].mxu0 %v1332
      %v1391 = vpop.f32.mrb[0].mxu0
      %v1392 = vadd.f32 %v1275, %v1391
      %v1393 = vpop.f32.mrb[0].mxu0
      %v1394 = vpop.f32.mrb[0].mxu0
      %v1395 = vadd.f32 %v1275, %v1394
      %v1396 = vpop.f32.mrb[0].mxu0
      %1397 = vmatprep.mubr.bf16.mxu0 0
      %1398 = vmatmul.mubr.bf16.gmra.mrb[0].mxu0 %v1335
      %v1399 = vpop.f32.mrb[0].mxu0
      %v1400 = vadd.f32 %v1275, %v1399
      %v1401 = vpop.f32.mrb[0].mxu0
      %v1402 = vpop.f32.mrb[0].mxu0
      %v1403 = vadd.f32 %v1275, %v1402
      %v1404 = vpop.f32.mrb[0].mxu0
      %1405 = vdwg.mxu0
      %v1406 = vadd.f32 %v1376, %v806
      %v1407 = vadd.f32 %v1379, %v809
      %v1408 = vadd.f32 %v1384, %v814
      %v1409 = vadd.f32 %v1387, %v817
      %v1410 = vadd.f32 %v1392, %v822
      %v1411 = vadd.f32 %v1395, %v825
      %v1412 = vadd.f32 %v1400, %v830
      %v1413 = vadd.f32 %v1403, %v833
      %v1414 = vmax.f32 %v1406, 0.0
      %v1415 = vmax.f32 %v1407, 0.0
      %v1416 = vmax.f32 %v1408, 0.0
      %v1417 = vmax.f32 %v1409, 0.0
      %v1418 = vmax.f32 %v1410, 0.0
      %v1419 = vmax.f32 %v1411, 0.0
      %v1420 = vmax.f32 %v1412, 0.0
      %v1421 = vmax.f32 %v1413, 0.0
      %1422 = vst [vmem:[%s313] sm:$0xff] %v1414
      %1423 = vst [vmem:[%s313 + $0x8] sm:$0xff] %v1415
      %1424 = vst [vmem:[%s313 + $0x10] sm:$0xff] %v1416
      %1425 = vst [vmem:[%s313 + $0x18] sm:$0xff] %v1417
      %1426 = vst [vmem:[%s313 + $0x20] sm:$0xff] %v1418
      %1427 = vst [vmem:[%s313 + $0x28] sm:$0xff] %v1419
      %1428 = vst [vmem:[%s313 + $0x30] sm:$0xff] %v1420
      %1429 = vst [vmem:[%s313 + $0x38] sm:$0xff] %v1421
      %1430 = vst [vmem:[%s318] sm:$0xff] %v1406
      %1431 = vst [vmem:[%s318 + $0x8] sm:$0xff] %v1407
      %1432 = vst [vmem:[%s318 + $0x10] sm:$0xff] %v1408
      %1433 = vst [vmem:[%s318 + $0x18] sm:$0xff] %v1409
      %1434 = vst [vmem:[%s318 + $0x20] sm:$0xff] %v1410
      %1435 = vst [vmem:[%s318 + $0x28] sm:$0xff] %v1411
      %1436 = vst [vmem:[%s318 + $0x30] sm:$0xff] %v1412
      %1437 = vst [vmem:[%s318 + $0x38] sm:$0xff] %v1413
      %p1438 = scmp.lt.s32.totalorder %s20, 1
      %s1439 = scalar_select %p1438, %s20, 1
      %s1440 = smul.addr %s1439, 8
      %s1441 = smul.addr %s1440, 8
      %s1442 = scalar_lea.vmem %s7, %s1441
      %p1443 = scmp.lt.s32.totalorder %s20, 1
      %s1444 = scalar_select %p1443, %s20, 1
      %s1445 = smul.addr %s1444, 8
      %s1446 = smul.addr %s1445, 8
      %s1447 = scalar_lea.vmem %s8, %s1446
      // Predicated region
      $region49: #{basic_block_forward.1} parent=47 // pred_check
        %p1448 = pneg %p190
      $region50: #{basic_block_forward.1} parent=47 // pred_check_branch
        %1450 = sbr.rel (%p1448) target = $region52
      $region51: #{basic_block_forward.1} parent=47 // pred_region
        _
      $region52: #{basic_block_forward.1} parent=47 // pred_fallthru
        _
      // Predicated region
      $region53: #{basic_block_forward.1} parent=47 // pred_check
        %p1451 = pneg %p216
      $region54: #{basic_block_forward.1} parent=47 // pred_check_branch
        %1453 = sbr.rel (%p1451) target = $region56
      $region55: #{basic_block_forward.1} parent=47 // pred_region
        _
      $region56: #{basic_block_forward.1} parent=47 // pred_fallthru
        _
    $region48: #{basic_block_forward.1} parent=5 // pred_fallthru
      _
    %p1454 = scmp.le.s32.totalorder 2, %s15
    // Predicated region
    $region57: #{basic_block_forward.1} parent=5 // pred_check
      %p1455 = pneg %p1454
    $region58: #{basic_block_forward.1} parent=5 // pred_check_branch
      %1457 = sbr.rel (%p1455) target = $region60
    $region59: #{basic_block_forward.1} parent=5 // pred_region
      %s1458 = ssub.s32 %s15, 2
      // Predicated region
      $region61: #{basic_block_forward.1} parent=59 // pred_check
        %p1459 = pneg %p196
      $region62: #{basic_block_forward.1} parent=59 // pred_check_branch
        %1461 = sbr.rel (%p1459) target = $region64
      $region63: #{basic_block_forward.1} parent=59 // pred_region
        %p1462 = scmp.lt.s32.totalorder %s21, 1
        %s1463 = scalar_select %p1462, %s21, 1
        %s1464 = smul.addr %s1463, 8
        %s1465 = smul.addr %s1464, 8
        %s1466 = scalar_lea.vmem %s7, %s1465
      $region64: #{basic_block_forward.1} parent=59 // pred_fallthru
        _
      // Predicated region
      $region65: #{basic_block_forward.1} parent=59 // pred_check
        %p1467 = pneg %p222
      $region66: #{basic_block_forward.1} parent=59 // pred_check_branch
        %1469 = sbr.rel (%p1467) target = $region68
      $region67: #{basic_block_forward.1} parent=59 // pred_region
        %p1470 = scmp.lt.s32.totalorder %s21, 1
        %s1471 = scalar_select %p1470, %s21, 1
        %s1472 = smul.addr %s1471, 8
        %s1473 = smul.addr %s1472, 8
        %s1474 = scalar_lea.vmem %s8, %s1473
      $region68: #{basic_block_forward.1} parent=59 // pred_fallthru
        _
    $region60: #{basic_block_forward.1} parent=5 // pred_fallthru
      _
  $region6: #{basic_block_forward.1} parent=0 // loop_footer
    %s19 = sadd.s32 1, %s15
  $region7: #{basic_block_forward.1} parent=0 // loop_footer_branch
    %14 = sbr.rel target = $region3
  $region8: #{basic_block_forward.1} parent=0 // loop_exit
    _

</llo_original>
